<compile_context>
chip_gen: v7x
topology: tpu7x:2x2x1
jax: 0.10.0
libtpu: 0.0.40
codegen_flags: <defaults>
</compile_context>

<pallas_src>
import functools

import jax
import jax.numpy as jnp
from jax import lax
from jax.experimental import pallas as pl
from jax.experimental.pallas import tpu as pltpu


def _fused_bn_relu_conv_kernel(x_ref, gamma_ref, beta_ref, w_ref, o_ref, *,
                               eps, m_total):
    """One grid step = one Cout tile.

    x_ref:     (N, Cin, HW) f32   -- whole activation, VMEM-resident
    gamma_ref: (Cin, 1)     f32
    beta_ref:  (Cin, 1)     f32
    w_ref:     (tco, Cin)   bf16  -- this step's slice of the 1x1-conv weight
    o_ref:     (N, tco, HW) f32
    """
    x = x_ref[...]                                            # (N, Cin, HW) f32

    # --- batch statistics (training-mode BN), centered for stability --------
    inv_m = 1.0 / m_total
    s_per_img = jnp.sum(x, axis=2, keepdims=True)             # (N, Cin, 1)
    mean = jnp.sum(s_per_img, axis=0, keepdims=True) * inv_m  # (1, Cin, 1)
    centered = x - mean                                       # (N, Cin, HW)
    sq_per_img = jnp.sum(centered * centered, axis=2, keepdims=True)
    var = jnp.sum(sq_per_img, axis=0, keepdims=True) * inv_m  # biased variance
    inv_std = lax.rsqrt(var + eps)                            # (1, Cin, 1)

    gamma = gamma_ref[...][None]                              # (1, Cin, 1)
    beta = beta_ref[...][None]                                # (1, Cin, 1)
    scale = gamma * inv_std
    shift = beta - mean * scale

    # --- BN scale/shift + ReLU, then 1x1 conv as an MXU matmul ---------------
    xr = jnp.maximum(x * scale + shift, 0.0).astype(jnp.bfloat16)  # (N, Cin, HW)
    w = w_ref[...]                                                 # (tco, Cin) bf16

    n = x.shape[0]
    for i in range(n):  # static, small N; unrolled
        acc = jnp.dot(w, xr[i], preferred_element_type=jnp.float32)  # (tco, HW)
        o_ref[i] = acc.astype(o_ref.dtype)


def bn_relu_conv1x1(x_nchw, gamma, beta, w_oihw, eps=1e-5, cout_tile=None):
    """BatchNorm2d(train) -> ReLU -> Conv2d(1x1, bias=False), NCHW in/out."""
    n, cin, h, wdim = x_nchw.shape
    cout = w_oihw.shape[0]
    hw = h * wdim
    m_total = n * hw

    x3d = x_nchw.reshape(n, cin, hw).astype(jnp.float32)      # NCHW-native, free reshape
    w2d = w_oihw.reshape(cout, cin).astype(jnp.bfloat16)      # (Cout, Cin), half the DMA bytes
    gamma2d = gamma.reshape(cin, 1).astype(jnp.float32)
    beta2d = beta.reshape(cin, 1).astype(jnp.float32)

    if cout_tile is None:
        # >= 2 grid steps so both v7x TensorCores are used; on v5e/v6e the
        # extra step costs ~0.35 us + a tiny in-VMEM stats recompute.
        cout_tile = cout // 2 if (cout % 2 == 0 and (cout // 2) % 8 == 0) else cout
    tco = min(cout, cout_tile)
    assert cout % tco == 0, (cout, tco)
    assert tco % 8 == 0 or tco == cout, (cout, tco)

    kernel = functools.partial(
        _fused_bn_relu_conv_kernel, eps=float(eps), m_total=float(m_total)
    )

    # VMEM budget (double-buffered): x ~ 2*N*Cin*HW*4, w ~ 2*tco*Cin*2,
    # out ~ 2*N*tco*HW*4  -> ~1.7 MB here; far under every chip's scoped limit.
    out3d = pl.pallas_call(
        kernel,
        out_shape=jax.ShapeDtypeStruct((n, cout, hw), jnp.float32),
        grid=(cout // tco,),
        in_specs=[
            pl.BlockSpec((n, cin, hw), lambda j: (0, 0, 0)),   # x (same block every step)
            pl.BlockSpec((cin, 1), lambda j: (0, 0)),          # gamma
            pl.BlockSpec((cin, 1), lambda j: (0, 0)),          # beta
            pl.BlockSpec((tco, cin), lambda j: (j, 0)),        # weight tile
        ],
        out_specs=pl.BlockSpec((n, tco, hw), lambda j: (0, j, 0)),
        compiler_params=pltpu.CompilerParams(
            dimension_semantics=("parallel",),                 # 2 TCs on v7x
        ),
    )(x3d, gamma2d, beta2d, w2d)

    return out3d.reshape(n, cout, h, wdim)


def _reference(x_nchw, gamma, beta, w_oihw, eps=1e-5):
    # Pure-JAX f32 reference of training-mode BN -> ReLU -> 1x1 conv.
    mean = jnp.mean(x_nchw, axis=(0, 2, 3), keepdims=True)
    var = jnp.mean((x_nchw - mean) ** 2, axis=(0, 2, 3), keepdims=True)
    xn = (x_nchw - mean) / jnp.sqrt(var + eps)
    xn = xn * gamma.reshape(1, -1, 1, 1) + beta.reshape(1, -1, 1, 1)
    xr = jnp.maximum(xn, 0.0)
    w2d = w_oihw.reshape(w_oihw.shape[0], w_oihw.shape[1])
    return jnp.einsum("nchw,oc->nohw", xr, w2d)


if __name__ == "__main__":
    key = jax.random.PRNGKey(0)
    k_x, k_w, k_g, k_b = jax.random.split(key, 4)

    # Shapes from the PyTorch module: x82 = randn(1, 256, 14, 14), Cout = 1024.
    N, CIN, H, W = 1, 256, 14, 14
    COUT = 1024

    x = jax.random.normal(k_x, (N, CIN, H, W), dtype=jnp.float32)
    conv_w = jax.random.normal(k_w, (COUT, CIN, 1, 1), dtype=jnp.float32) * 0.05
    gamma = 1.0 + 0.1 * jax.random.normal(k_g, (CIN,), dtype=jnp.float32)
    beta = 0.1 * jax.random.normal(k_b, (CIN,), dtype=jnp.float32)

    out = bn_relu_conv1x1(x, gamma, beta, conv_w)
    out = jax.block_until_ready(out)

    ref = _reference(x, gamma, beta, conv_w)
    assert out.shape == (N, COUT, H, W), out.shape
    # bf16 MXU operands (f32 accumulation) -> tolerance loosened vs pure-f32 ref.
    assert jnp.allclose(out, ref, atol=2e-2, rtol=2e-2), float(
        jnp.max(jnp.abs(out - ref))
    )

    print("KERNEL_OK")
</pallas_src>

<mosaic_0001>
module attributes {stable_mosaic.version = 11 : i64} {
  func.func @_fused_bn_relu_conv_kernel(%arg0: i32, %arg1: memref<1x256x196xf32, #tpu.memory_space<vmem>>, %arg2: memref<256x1xf32, #tpu.memory_space<vmem>>, %arg3: memref<256x1xf32, #tpu.memory_space<vmem>>, %arg4: memref<512x256xbf16, #tpu.memory_space<vmem>>, %arg5: memref<1x512x196xf32, #tpu.memory_space<vmem>>) attributes {dimension_semantics = [#tpu.dimension_semantics<parallel>], iteration_bounds = array<i64: 2>, scalar_prefetch = 0 : i64, scratch_operands = 0 : i64, tpu.core_type = #tpu.core_type<tc>, window_params = [{pipeline_mode = #tpu.pipeline_mode<synchronous>, transform_indices = @transform_0, window_bounds = array<i64: 1, 256, 196>}, {pipeline_mode = #tpu.pipeline_mode<synchronous>, transform_indices = @transform_1, window_bounds = array<i64: 256, 1>}, {pipeline_mode = #tpu.pipeline_mode<synchronous>, transform_indices = @transform_2, window_bounds = array<i64: 256, 1>}, {transform_indices = @transform_3, window_bounds = array<i64: 512, 256>}, {transform_indices = @transform_4, window_bounds = array<i64: 1, 512, 196>}]} {
    %c0 = arith.constant 0 : index
    %c0_0 = arith.constant 0 : index
    %c0_1 = arith.constant 0 : index
    %0 = vector.load %arg1[%c0, %c0_0, %c0_1] : memref<1x256x196xf32, #tpu.memory_space<vmem>>, vector<1x256x196xf32>
    %cst = arith.constant dense<0.000000e+00> : vector<1x256xf32>
    %1 = vector.multi_reduction <add>, %0, %cst [2] : vector<1x256x196xf32> to vector<1x256xf32>
    %2 = vector.shape_cast %1 : vector<1x256xf32> to vector<1x256x1xf32>
    %cst_2 = arith.constant dense<0.000000e+00> : vector<256x1xf32>
    %3 = vector.multi_reduction <add>, %2, %cst_2 [0] : vector<1x256x1xf32> to vector<256x1xf32>
    %4 = vector.shape_cast %3 : vector<256x1xf32> to vector<1x256x1xf32>
    %cst_3 = arith.constant 0.00510204071 : f32
    %5 = vector.broadcast %cst_3 : f32 to vector<1x256x1xf32>
    %6 = arith.mulf %4, %5 : vector<1x256x1xf32>
    %7 = vector.broadcast %6 : vector<1x256x1xf32> to vector<1x256x196xf32>
    %8 = arith.subf %0, %7 : vector<1x256x196xf32>
    %9 = arith.mulf %8, %8 : vector<1x256x196xf32>
    %cst_4 = arith.constant dense<0.000000e+00> : vector<1x256xf32>
    %10 = vector.multi_reduction <add>, %9, %cst_4 [2] : vector<1x256x196xf32> to vector<1x256xf32>
    %11 = vector.shape_cast %10 : vector<1x256xf32> to vector<1x256x1xf32>
    %cst_5 = arith.constant dense<0.000000e+00> : vector<256x1xf32>
    %12 = vector.multi_reduction <add>, %11, %cst_5 [0] : vector<1x256x1xf32> to vector<256x1xf32>
    %13 = vector.shape_cast %12 : vector<256x1xf32> to vector<1x256x1xf32>
    %cst_6 = arith.constant 0.00510204071 : f32
    %14 = vector.broadcast %cst_6 : f32 to vector<1x256x1xf32>
    %15 = arith.mulf %13, %14 : vector<1x256x1xf32>
    %cst_7 = arith.constant 9.99999974E-6 : f32
    %16 = vector.broadcast %cst_7 : f32 to vector<1x256x1xf32>
    %17 = arith.addf %15, %16 : vector<1x256x1xf32>
    %18 = math.rsqrt %17 : vector<1x256x1xf32>
    %c0_8 = arith.constant 0 : index
    %c0_9 = arith.constant 0 : index
    %19 = vector.load %arg2[%c0_8, %c0_9] : memref<256x1xf32, #tpu.memory_space<vmem>>, vector<256x1xf32>
    %20 = vector.shape_cast %19 : vector<256x1xf32> to vector<1x256x1xf32>
    %c0_10 = arith.constant 0 : index
    %c0_11 = arith.constant 0 : index
    %21 = vector.load %arg3[%c0_10, %c0_11] : memref<256x1xf32, #tpu.memory_space<vmem>>, vector<256x1xf32>
    %22 = vector.shape_cast %21 : vector<256x1xf32> to vector<1x256x1xf32>
    %23 = arith.mulf %20, %18 : vector<1x256x1xf32>
    %24 = arith.mulf %6, %23 : vector<1x256x1xf32>
    %25 = arith.subf %22, %24 : vector<1x256x1xf32>
    %26 = vector.broadcast %23 : vector<1x256x1xf32> to vector<1x256x196xf32>
    %27 = arith.mulf %0, %26 : vector<1x256x196xf32>
    %28 = vector.broadcast %25 : vector<1x256x1xf32> to vector<1x256x196xf32>
    %29 = arith.addf %27, %28 : vector<1x256x196xf32>
    %cst_12 = arith.constant 0.000000e+00 : f32
    %30 = vector.broadcast %cst_12 : f32 to vector<1x256x196xf32>
    %31 = arith.maximumf %29, %30 : vector<1x256x196xf32>
    %32 = arith.truncf %31 : vector<1x256x196xf32> to vector<1x256x196xbf16>
    %c0_13 = arith.constant 0 : index
    %c0_14 = arith.constant 0 : index
    %33 = vector.load %arg4[%c0_13, %c0_14] : memref<512x256xbf16, #tpu.memory_space<vmem>>, vector<512x256xbf16>
    %34 = vector.shape_cast %32 : vector<1x256x196xbf16> to vector<256x196xbf16>
    %cst_15 = arith.constant dense<0.000000e+00> : vector<512x196xf32>
    %35 = tpu.matmul %33, %34, %cst_15 {dimension_numbers = #tpu.dot_dimension_numbers<[1], [0], [0], [1], [0, 0, 1, 1], [], []>} : vector<512x256xbf16>, vector<256x196xbf16>, vector<512x196xf32> -> vector<512x196xf32>
    %c0_16 = arith.constant 0 : index
    %c0_17 = arith.constant 0 : index
    %c0_18 = arith.constant 0 : index
    %36 = vector.load %arg5[%c0_16, %c0_17, %c0_18] : memref<1x512x196xf32, #tpu.memory_space<vmem>>, vector<1x512x196xf32>
    %37 = vector.shape_cast %36 : vector<1x512x196xf32> to vector<512x196xf32>
    %38 = vector.shape_cast %35 : vector<512x196xf32> to vector<1x512x196xf32>
    tpu.vector_store %arg5[%c0_16, %c0_17, %c0_18], %38 {strides = array<i32>} : memref<1x512x196xf32, #tpu.memory_space<vmem>>, vector<1x512x196xf32>,
    return
  }
  func.func @transform_0(%arg0: i32) -> (i32, i32, i32) {
    %c0_i32 = arith.constant 0 : i32
    %c0_i32_0 = arith.constant 0 : i32
    %c0_i32_1 = arith.constant 0 : i32
    %c0_i32_2 = arith.constant 0 : i32
    return %c0_i32, %c0_i32_0, %c0_i32_1 : i32, i32, i32
  }
  func.func @transform_1(%arg0: i32) -> (i32, i32) {
    %c0_i32 = arith.constant 0 : i32
    %c0_i32_0 = arith.constant 0 : i32
    %c0_i32_1 = arith.constant 0 : i32
    return %c0_i32, %c0_i32_0 : i32, i32
  }
  func.func @transform_2(%arg0: i32) -> (i32, i32) {
    %c0_i32 = arith.constant 0 : i32
    %c0_i32_0 = arith.constant 0 : i32
    %c0_i32_1 = arith.constant 0 : i32
    return %c0_i32, %c0_i32_0 : i32, i32
  }
  func.func @transform_3(%arg0: i32) -> (i32, i32) {
    %c0_i32 = arith.constant 0 : i32
    %c0_i32_0 = arith.constant 0 : i32
    return %arg0, %c0_i32 : i32, i32
  }
  func.func @transform_4(%arg0: i32) -> (i32, i32, i32) {
    %c0_i32 = arith.constant 0 : i32
    %c0_i32_0 = arith.constant 0 : i32
    %c0_i32_1 = arith.constant 0 : i32
    return %c0_i32, %arg0, %c0_i32_0 : i32, i32, i32
  }
}

</mosaic_0001>

<llo_original>
// kernel: tpu_custom_call.1
$region0: #{tpu_custom_call.1}
  #allocation0 [shape = 'u32[]', space=smem, size = 0x4, offset = 0x4, fixed_abs, tag = 'smem constant byte address 0x4 - core index']
  #allocation1 [shape = 'u32[144,128]{1,0:T(1,128)}', space=vmem, size = 0x12000, scoped, tag = 'internal scratch']
  %s0 = inlined_call_operand.vmem [shape: f32[1,256,196], index: 0, kind: input, shape index: {}]
  %s1 = inlined_call_operand.vmem [shape: f32[256,1], index: 1, kind: input, shape index: {}]
  %s2 = inlined_call_operand.vmem [shape: f32[256,1], index: 2, kind: input, shape index: {}]
  %s3 = inlined_call_operand.vmem [shape: bf16[1024,256], index: 3, kind: input, shape index: {}]
  %s4 = inlined_call_operand.vmem [shape: f32[1,1024,196], index: 4, kind: output, shape index: {}]
  %s5 = sld [smem:[#allocation0]]
  $region49: #{tpu_custom_call.1} parent=0
    _
  %s7 = ssub.s32 1, %s5
  %s8 = scalar_select 0, %s7, %s5
  loop: start=0, step=1, limit=4
  $region2: #{tpu_custom_call.1} parent=0 // loop_pre_header
    _
  $region3: #{tpu_custom_call.1} parent=0 // loop_header
    %s10 = sphi 0, %s14
    %p11 = scmp.ge.s32.totalorder %s10, 4
    %s18 = sphi 0, %s18
    %s20 = sphi 0, %s18
    %s21 = sphi 0, %s20
    %s35 = sphi 0, %s21
    %s39 = sphi 0, %s39
    %s41 = sphi 0, %s39
    %s42 = sphi 0, %s41
    %s56 = sphi 0, %s42
    %s60 = sphi 0, %s60
    %s62 = sphi 0, %s60
    %s63 = sphi 0, %s62
    %s77 = sphi 0, %s63
    %s83 = sphi 0, %s85
    %s86 = sphi 0, %s83
    %s87 = sphi 0, %s86
    %s103 = sphi 0, %s87
    %s109 = sphi 0, %s111
    %s112 = sphi 0, %s109
    %s113 = sphi 0, %s112
    %s129 = sphi 0, %s113
  $region4: #{tpu_custom_call.1} parent=0 // loop_header_branch
    %13 = sbr.rel (%p11) target = $region8
  $region5: #{tpu_custom_call.1} parent=0 // loop_body
    %s15 = ssub.s32 %s10, 1
    %s16 = ssub.s32 %s10, 2
    %s17 = sadd.s32 %s10, 1
    %s19 = sadd.s32 %s18, 1
    %p22 = scmp.eq.s32.totalorder %s10, 1
    %p23 = scmp.ne.s32.totalorder %s18, %s20
    %p24 = scmp.eq.s32.totalorder %s10, 0
    %p25 = por %p23, %p24
    %p26 = scmp.ne.s32.totalorder %s18, %s20
    %p27 = scmp.eq.s32.totalorder %s15, 1
    %p28 = por %p26, %p27
    %p29 = scmp.ne.s32.totalorder %s20, %s21
    %p30 = scmp.eq.s32.totalorder %s15, 0
    %p31 = por %p29, %p30
    %p32 = scmp.ne.s32.totalorder %s20, %s21
    %p33 = scmp.eq.s32.totalorder %s16, 1
    %p34 = por %p32, %p33
    %p36 = scmp.ne.s32.totalorder %s21, %s35
    %p37 = scmp.eq.s32.totalorder %s16, 0
    %p38 = por %p36, %p37
    %s40 = sadd.s32 %s39, 1
    %p43 = scmp.eq.s32.totalorder %s10, 1
    %p44 = scmp.ne.s32.totalorder %s39, %s41
    %p45 = scmp.eq.s32.totalorder %s10, 0
    %p46 = por %p44, %p45
    %p47 = scmp.ne.s32.totalorder %s39, %s41
    %p48 = scmp.eq.s32.totalorder %s15, 1
    %p49 = por %p47, %p48
    %p50 = scmp.ne.s32.totalorder %s41, %s42
    %p51 = scmp.eq.s32.totalorder %s15, 0
    %p52 = por %p50, %p51
    %p53 = scmp.ne.s32.totalorder %s41, %s42
    %p54 = scmp.eq.s32.totalorder %s16, 1
    %p55 = por %p53, %p54
    %p57 = scmp.ne.s32.totalorder %s42, %s56
    %p58 = scmp.eq.s32.totalorder %s16, 0
    %p59 = por %p57, %p58
    %s61 = sadd.s32 %s60, 1
    %p64 = scmp.eq.s32.totalorder %s10, 1
    %p65 = scmp.ne.s32.totalorder %s60, %s62
    %p66 = scmp.eq.s32.totalorder %s10, 0
    %p67 = por %p65, %p66
    %p68 = scmp.ne.s32.totalorder %s60, %s62
    %p69 = scmp.eq.s32.totalorder %s15, 1
    %p70 = por %p68, %p69
    %p71 = scmp.ne.s32.totalorder %s62, %s63
    %p72 = scmp.eq.s32.totalorder %s15, 0
    %p73 = por %p71, %p72
    %p74 = scmp.ne.s32.totalorder %s62, %s63
    %p75 = scmp.eq.s32.totalorder %s16, 1
    %p76 = por %p74, %p75
    %p78 = scmp.ne.s32.totalorder %s63, %s77
    %p79 = scmp.eq.s32.totalorder %s16, 0
    %p80 = por %p78, %p79
    %s81 = ssub.s32 %s10, %s17
    %p82 = scmp.eq.s32.totalorder %s81, 0
    %s84 = sadd.s32 %s83, 1
    %s85 = scalar_select %p82, %s83, %s84
    %p88 = pneg %p82
    %p89 = scmp.eq.s32.totalorder %s10, 1
    %p90 = por %p88, %p89
    %p91 = scmp.ne.s32.totalorder %s83, %s86
    %p92 = scmp.eq.s32.totalorder %s10, 0
    %p93 = por %p91, %p92
    %p94 = scmp.ne.s32.totalorder %s83, %s86
    %p95 = scmp.eq.s32.totalorder %s15, 1
    %p96 = por %p94, %p95
    %p97 = scmp.ne.s32.totalorder %s86, %s87
    %p98 = scmp.eq.s32.totalorder %s15, 0
    %p99 = por %p97, %p98
    %p100 = scmp.ne.s32.totalorder %s86, %s87
    %p101 = scmp.eq.s32.totalorder %s16, 1
    %p102 = por %p100, %p101
    %p104 = scmp.ne.s32.totalorder %s87, %s103
    %p105 = scmp.eq.s32.totalorder %s16, 0
    %p106 = por %p104, %p105
    %s107 = ssub.s32 %s10, %s17
    %p108 = scmp.eq.s32.totalorder %s107, 0
    %s110 = sadd.s32 %s109, 1
    %s111 = scalar_select %p108, %s109, %s110
    %p114 = pneg %p108
    %p115 = scmp.eq.s32.totalorder %s10, 1
    %p116 = por %p114, %p115
    %p117 = scmp.ne.s32.totalorder %s109, %s112
    %p118 = scmp.eq.s32.totalorder %s10, 0
    %p119 = por %p117, %p118
    %p120 = scmp.ne.s32.totalorder %s109, %s112
    %p121 = scmp.eq.s32.totalorder %s15, 1
    %p122 = por %p120, %p121
    %p123 = scmp.ne.s32.totalorder %s112, %s113
    %p124 = scmp.eq.s32.totalorder %s15, 0
    %p125 = por %p123, %p124
    %p126 = scmp.ne.s32.totalorder %s112, %s113
    %p127 = scmp.eq.s32.totalorder %s16, 1
    %p128 = por %p126, %p127
    %p130 = scmp.ne.s32.totalorder %s113, %s129
    %p131 = scmp.eq.s32.totalorder %s16, 0
    %p132 = por %p130, %p131
    %p133 = scmp.le.s32.totalorder 1, %s10
    %p134 = scmp.lt.s32.totalorder %s10, 3
    %p135 = pnand %p133, %p134
    %p136 = pneg %p135
    // Predicated region
    $region9: #{tpu_custom_call.1} parent=5 // pred_check
      _
    $region10: #{tpu_custom_call.1} parent=5 // pred_check_branch
      %138 = sbr.rel (%p135) target = $region12
    $region11: #{tpu_custom_call.1} parent=5 // pred_region
      %s139 = ssub.s32 %s10, 1
      // Predicated region
      $region13: #{tpu_custom_call.1} parent=11 // pred_check
        %p140 = pneg %p31
      $region14: #{tpu_custom_call.1} parent=11 // pred_check_branch
        %142 = sbr.rel (%p140) target = $region16
      $region15: #{tpu_custom_call.1} parent=11 // pred_region
        _
      $region16: #{tpu_custom_call.1} parent=11 // pred_fallthru
        _
      // Predicated region
      $region17: #{tpu_custom_call.1} parent=11 // pred_check
        %p143 = pneg %p52
      $region18: #{tpu_custom_call.1} parent=11 // pred_check_branch
        %145 = sbr.rel (%p143) target = $region20
      $region19: #{tpu_custom_call.1} parent=11 // pred_region
        _
      $region20: #{tpu_custom_call.1} parent=11 // pred_fallthru
        _
      // Predicated region
      $region21: #{tpu_custom_call.1} parent=11 // pred_check
        %p146 = pneg %p73
      $region22: #{tpu_custom_call.1} parent=11 // pred_check_branch
        %148 = sbr.rel (%p146) target = $region24
      $region23: #{tpu_custom_call.1} parent=11 // pred_region
        _
      $region24: #{tpu_custom_call.1} parent=11 // pred_fallthru
        _
    $region12: #{tpu_custom_call.1} parent=5 // pred_fallthru
      _
    %p149 = scmp.lt.s32.totalorder %s10, 2
    // Predicated region
    $region25: #{tpu_custom_call.1} parent=5 // pred_check
      %p150 = pneg %p149
    $region26: #{tpu_custom_call.1} parent=5 // pred_check_branch
      %152 = sbr.rel (%p150) target = $region28
    $region27: #{tpu_custom_call.1} parent=5 // pred_region
      // Predicated region
      $region29: #{tpu_custom_call.1} parent=27 // pred_check
        %p153 = pneg %p93
      $region30: #{tpu_custom_call.1} parent=27 // pred_check_branch
        %155 = sbr.rel (%p153) target = $region32
      $region31: #{tpu_custom_call.1} parent=27 // pred_region
        %s156 = smul.u32 64, %s10
        %p157 = scmp.lt.s32.totalorder %s156, 127
        %s158 = scalar_select %p157, %s156, 127
        %s159 = smul.addr %s158, 2
        %s160 = smul.addr %s159, 4
        %s161 = scalar_lea.vmem %s3, %s160
        %s162 = smul.u32 64, %s10
      $region32: #{tpu_custom_call.1} parent=27 // pred_fallthru
        _
    $region28: #{tpu_custom_call.1} parent=5 // pred_fallthru
      _
    %p163 = scmp.le.s32.totalorder 1, %s10
    %p164 = scmp.lt.s32.totalorder %s10, 3
    %p165 = pnand %p163, %p164
    %p166 = pneg %p165
    // Predicated region
    $region33: #{tpu_custom_call.1} parent=5 // pred_check
      _
    $region34: #{tpu_custom_call.1} parent=5 // pred_check_branch
      %168 = sbr.rel (%p165) target = $region36
    $region35: #{tpu_custom_call.1} parent=5 // pred_region
      %s169 = ssub.s32 %s10, 1
      %p170 = pneg %p31
      %p171 = pneg %p28
      %p172 = pneg %p52
      %p173 = pneg %p49
      %p174 = pneg %p73
      %p175 = pneg %p70
      %s176 = smul.u32 64, %s15
      %p177 = scmp.lt.s32.totalorder %s176, 127
      %s178 = scalar_select %p177, %s176, 127
      %s179 = smul.addr %s178, 2
      %s180 = smul.addr %s179, 4
      %s181 = scalar_lea.vmem %s3, %s180
      %p182 = pneg %p99
      %p183 = pneg %p96
      %p184 = pneg %p125
      %p185 = pneg %p122
      %s186 = smul.u32 64, %s15
      %p187 = scmp.lt.s32.totalorder %s186, 127
      %s188 = scalar_select %p187, %s186, 127
      %s189 = smul.addr %s188, 2
      %s190 = smul.addr %s189, 8
      %s191 = scalar_lea.vmem %s4, %s190
      %s192 = smul.u32 64, %s15
      %p193 = scmp.lt.s32.totalorder %s192, 127
      %s194 = scalar_select %p193, %s192, 127
      %s195 = smul.addr %s194, 2
      %s196 = smul.addr %s195, 4
      %s197 = scalar_lea.vmem %s3, %s196
      %s198 = smul.u32 64, %s15
      %s199 = smul.u32 64, %s15
      %p200 = scmp.lt.s32.totalorder %s199, 127
      %s201 = scalar_select %p200, %s199, 127
      %s202 = smul.addr %s201, 2
      %s203 = smul.addr %s202, 8
      %s204 = scalar_lea.vmem %s4, %s203
      %s205 = smul.u32 64, %s15
      %v206 = vld [vmem:[%s0] sm:$0xff]
      %v207 = vld [vmem:[%s0 + $0x8] sm:$0xff]
      %v208 = vld [vmem:[%s0 + $0x10] sm:$0xff]
      %v209 = vld [vmem:[%s0 + $0x18] sm:$0xff]
      %v210 = vld [vmem:[%s0 + $0x20] sm:$0xff]
      %v211 = vld [vmem:[%s0 + $0x28] sm:$0xff]
      %v212 = vld [vmem:[%s0 + $0x30] sm:$0xff]
      %v213 = vld [vmem:[%s0 + $0x38] sm:$0xff]
      %v214 = vld [vmem:[%s0 + $0x40] sm:$0xff]
      %v215 = vld [vmem:[%s0 + $0x48] sm:$0xff]
      %v216 = vld [vmem:[%s0 + $0x50] sm:$0xff]
      %v217 = vld [vmem:[%s0 + $0x58] sm:$0xff]
      %v218 = vld [vmem:[%s0 + $0x60] sm:$0xff]
      %v219 = vld [vmem:[%s0 + $0x68] sm:$0xff]
      %v220 = vld [vmem:[%s0 + $0x70] sm:$0xff]
      %v221 = vld [vmem:[%s0 + $0x78] sm:$0xff]
      %v222 = vld [vmem:[%s0 + $0x80] sm:$0xff]
      %v223 = vld [vmem:[%s0 + $0x88] sm:$0xff]
      %v224 = vld [vmem:[%s0 + $0x90] sm:$0xff]
      %v225 = vld [vmem:[%s0 + $0x98] sm:$0xff]
      %v226 = vld [vmem:[%s0 + $0xa0] sm:$0xff]
      %v227 = vld [vmem:[%s0 + $0xa8] sm:$0xff]
      %v228 = vld [vmem:[%s0 + $0xb0] sm:$0xff]
      %v229 = vld [vmem:[%s0 + $0xb8] sm:$0xff]
      %v230 = vld [vmem:[%s0 + $0xc0] sm:$0xff]
      %v231 = vld [vmem:[%s0 + $0xc8] sm:$0xff]
      %v232 = vld [vmem:[%s0 + $0xd0] sm:$0xff]
      %v233 = vld [vmem:[%s0 + $0xd8] sm:$0xff]
      %v234 = vld [vmem:[%s0 + $0xe0] sm:$0xff]
      %v235 = vld [vmem:[%s0 + $0xe8] sm:$0xff]
      %v236 = vld [vmem:[%s0 + $0xf0] sm:$0xff]
      %v237 = vld [vmem:[%s0 + $0xf8] sm:$0xff]
      %v238 = vld [vmem:[%s0 + $0x100] sm:$0xff]
      %v239 = vld [vmem:[%s0 + $0x108] sm:$0xff]
      %v240 = vld [vmem:[%s0 + $0x110] sm:$0xff]
      %v241 = vld [vmem:[%s0 + $0x118] sm:$0xff]
      %v242 = vld [vmem:[%s0 + $0x120] sm:$0xff]
      %v243 = vld [vmem:[%s0 + $0x128] sm:$0xff]
      %v244 = vld [vmem:[%s0 + $0x130] sm:$0xff]
      %v245 = vld [vmem:[%s0 + $0x138] sm:$0xff]
      %v246 = vld [vmem:[%s0 + $0x140] sm:$0xff]
      %v247 = vld [vmem:[%s0 + $0x148] sm:$0xff]
      %v248 = vld [vmem:[%s0 + $0x150] sm:$0xff]
      %v249 = vld [vmem:[%s0 + $0x158] sm:$0xff]
      %v250 = vld [vmem:[%s0 + $0x160] sm:$0xff]
      %v251 = vld [vmem:[%s0 + $0x168] sm:$0xff]
      %v252 = vld [vmem:[%s0 + $0x170] sm:$0xff]
      %v253 = vld [vmem:[%s0 + $0x178] sm:$0xff]
      %v254 = vld [vmem:[%s0 + $0x180] sm:$0xff]
      %v255 = vld [vmem:[%s0 + $0x188] sm:$0xff]
      %v256 = vld [vmem:[%s0 + $0x190] sm:$0xff]
      %v257 = vld [vmem:[%s0 + $0x198] sm:$0xff]
      %v258 = vld [vmem:[%s0 + $0x1a0] sm:$0xff]
      %v259 = vld [vmem:[%s0 + $0x1a8] sm:$0xff]
      %v260 = vld [vmem:[%s0 + $0x1b0] sm:$0xff]
      %v261 = vld [vmem:[%s0 + $0x1b8] sm:$0xff]
      %v262 = vld [vmem:[%s0 + $0x1c0] sm:$0xff]
      %v263 = vld [vmem:[%s0 + $0x1c8] sm:$0xff]
      %v264 = vld [vmem:[%s0 + $0x1d0] sm:$0xff]
      %v265 = vld [vmem:[%s0 + $0x1d8] sm:$0xff]
      %v266 = vld [vmem:[%s0 + $0x1e0] sm:$0xff]
      %v267 = vld [vmem:[%s0 + $0x1e8] sm:$0xff]
      %v268 = vld [vmem:[%s0 + $0x1f0] sm:$0xff]
      %v269 = vld [vmem:[%s0 + $0x1f8] sm:$0xff]
      %vm270 = vcmask 556032
      %v271 = vsel %vm270, %v207, 0.0
      %v272 = vadd.f32 %v206, %v271
      %273 = vadd.xlane.f32.xlu0 %v272
      %v274 = vpop.xlane.xlu0 %273
      %v275 = vsel %vm270, %v209, 0.0
      %v276 = vadd.f32 %v208, %v275
      %277 = vadd.xlane.f32.xlu0 %v276
      %v278 = vpop.xlane.xlu0 %277
      %v279 = vsel %vm270, %v211, 0.0
      %v280 = vadd.f32 %v210, %v279
      %281 = vadd.xlane.f32.xlu0 %v280
      %v282 = vpop.xlane.xlu0 %281
      %v283 = vsel %vm270, %v213, 0.0
      %v284 = vadd.f32 %v212, %v283
      %285 = vadd.xlane.f32.xlu0 %v284
      %v286 = vpop.xlane.xlu0 %285
      %v287 = vsel %vm270, %v215, 0.0
      %v288 = vadd.f32 %v214, %v287
      %289 = vadd.xlane.f32.xlu0 %v288
      %v290 = vpop.xlane.xlu0 %289
      %v291 = vsel %vm270, %v217, 0.0
      %v292 = vadd.f32 %v216, %v291
      %293 = vadd.xlane.f32.xlu0 %v292
      %v294 = vpop.xlane.xlu0 %293
      %v295 = vsel %vm270, %v219, 0.0
      %v296 = vadd.f32 %v218, %v295
      %297 = vadd.xlane.f32.xlu0 %v296
      %v298 = vpop.xlane.xlu0 %297
      %v299 = vsel %vm270, %v221, 0.0
      %v300 = vadd.f32 %v220, %v299
      %301 = vadd.xlane.f32.xlu0 %v300
      %v302 = vpop.xlane.xlu0 %301
      %v303 = vsel %vm270, %v223, 0.0
      %v304 = vadd.f32 %v222, %v303
      %305 = vadd.xlane.f32.xlu0 %v304
      %v306 = vpop.xlane.xlu0 %305
      %v307 = vsel %vm270, %v225, 0.0
      %v308 = vadd.f32 %v224, %v307
      %309 = vadd.xlane.f32.xlu0 %v308
      %v310 = vpop.xlane.xlu0 %309
      %v311 = vsel %vm270, %v227, 0.0
      %v312 = vadd.f32 %v226, %v311
      %313 = vadd.xlane.f32.xlu0 %v312
      %v314 = vpop.xlane.xlu0 %313
      %v315 = vsel %vm270, %v229, 0.0
      %v316 = vadd.f32 %v228, %v315
      %317 = vadd.xlane.f32.xlu0 %v316
      %v318 = vpop.xlane.xlu0 %317
      %v319 = vsel %vm270, %v231, 0.0
      %v320 = vadd.f32 %v230, %v319
      %321 = vadd.xlane.f32.xlu0 %v320
      %v322 = vpop.xlane.xlu0 %321
      %v323 = vsel %vm270, %v233, 0.0
      %v324 = vadd.f32 %v232, %v323
      %325 = vadd.xlane.f32.xlu0 %v324
      %v326 = vpop.xlane.xlu0 %325
      %v327 = vsel %vm270, %v235, 0.0
      %v328 = vadd.f32 %v234, %v327
      %329 = vadd.xlane.f32.xlu0 %v328
      %v330 = vpop.xlane.xlu0 %329
      %v331 = vsel %vm270, %v237, 0.0
      %v332 = vadd.f32 %v236, %v331
      %333 = vadd.xlane.f32.xlu0 %v332
      %v334 = vpop.xlane.xlu0 %333
      %v335 = vsel %vm270, %v239, 0.0
      %v336 = vadd.f32 %v238, %v335
      %337 = vadd.xlane.f32.xlu0 %v336
      %v338 = vpop.xlane.xlu0 %337
      %v339 = vsel %vm270, %v241, 0.0
      %v340 = vadd.f32 %v240, %v339
      %341 = vadd.xlane.f32.xlu0 %v340
      %v342 = vpop.xlane.xlu0 %341
      %v343 = vsel %vm270, %v243, 0.0
      %v344 = vadd.f32 %v242, %v343
      %345 = vadd.xlane.f32.xlu0 %v344
      %v346 = vpop.xlane.xlu0 %345
      %v347 = vsel %vm270, %v245, 0.0
      %v348 = vadd.f32 %v244, %v347
      %349 = vadd.xlane.f32.xlu0 %v348
      %v350 = vpop.xlane.xlu0 %349
      %v351 = vsel %vm270, %v247, 0.0
      %v352 = vadd.f32 %v246, %v351
      %353 = vadd.xlane.f32.xlu0 %v352
      %v354 = vpop.xlane.xlu0 %353
      %v355 = vsel %vm270, %v249, 0.0
      %v356 = vadd.f32 %v248, %v355
      %357 = vadd.xlane.f32.xlu0 %v356
      %v358 = vpop.xlane.xlu0 %357
      %v359 = vsel %vm270, %v251, 0.0
      %v360 = vadd.f32 %v250, %v359
      %361 = vadd.xlane.f32.xlu0 %v360
      %v362 = vpop.xlane.xlu0 %361
      %v363 = vsel %vm270, %v253, 0.0
      %v364 = vadd.f32 %v252, %v363
      %365 = vadd.xlane.f32.xlu0 %v364
      %v366 = vpop.xlane.xlu0 %365
      %v367 = vsel %vm270, %v255, 0.0
      %v368 = vadd.f32 %v254, %v367
      %369 = vadd.xlane.f32.xlu0 %v368
      %v370 = vpop.xlane.xlu0 %369
      %v371 = vsel %vm270, %v257, 0.0
      %v372 = vadd.f32 %v256, %v371
      %373 = vadd.xlane.f32.xlu0 %v372
      %v374 = vpop.xlane.xlu0 %373
      %v375 = vsel %vm270, %v259, 0.0
      %v376 = vadd.f32 %v258, %v375
      %377 = vadd.xlane.f32.xlu0 %v376
      %v378 = vpop.xlane.xlu0 %377
      %v379 = vsel %vm270, %v261, 0.0
      %v380 = vadd.f32 %v260, %v379
      %381 = vadd.xlane.f32.xlu0 %v380
      %v382 = vpop.xlane.xlu0 %381
      %v383 = vsel %vm270, %v263, 0.0
      %v384 = vadd.f32 %v262, %v383
      %385 = vadd.xlane.f32.xlu0 %v384
      %v386 = vpop.xlane.xlu0 %385
      %v387 = vsel %vm270, %v265, 0.0
      %v388 = vadd.f32 %v264, %v387
      %389 = vadd.xlane.f32.xlu0 %v388
      %v390 = vpop.xlane.xlu0 %389
      %v391 = vsel %vm270, %v267, 0.0
      %v392 = vadd.f32 %v266, %v391
      %393 = vadd.xlane.f32.xlu0 %v392
      %v394 = vpop.xlane.xlu0 %393
      %v395 = vsel %vm270, %v269, 0.0
      %v396 = vadd.f32 %v268, %v395
      %397 = vadd.xlane.f32.xlu0 %v396
      %v398 = vpop.xlane.xlu0 %397
      %v399 = vadd.f32 %v274, 0.0
      %v400 = vadd.f32 %v278, 0.0
      %v401 = vadd.f32 %v282, 0.0
      %v402 = vadd.f32 %v286, 0.0
      %v403 = vadd.f32 %v290, 0.0
      %v404 = vadd.f32 %v294, 0.0
      %v405 = vadd.f32 %v298, 0.0
      %v406 = vadd.f32 %v302, 0.0
      %v407 = vadd.f32 %v306, 0.0
      %v408 = vadd.f32 %v310, 0.0
      %v409 = vadd.f32 %v314, 0.0
      %v410 = vadd.f32 %v318, 0.0
      %v411 = vadd.f32 %v322, 0.0
      %v412 = vadd.f32 %v326, 0.0
      %v413 = vadd.f32 %v330, 0.0
      %v414 = vadd.f32 %v334, 0.0
      %v415 = vadd.f32 %v338, 0.0
      %v416 = vadd.f32 %v342, 0.0
      %v417 = vadd.f32 %v346, 0.0
      %v418 = vadd.f32 %v350, 0.0
      %v419 = vadd.f32 %v354, 0.0
      %v420 = vadd.f32 %v358, 0.0
      %v421 = vadd.f32 %v362, 0.0
      %v422 = vadd.f32 %v366, 0.0
      %v423 = vadd.f32 %v370, 0.0
      %v424 = vadd.f32 %v374, 0.0
      %v425 = vadd.f32 %v378, 0.0
      %v426 = vadd.f32 %v382, 0.0
      %v427 = vadd.f32 %v386, 0.0
      %v428 = vadd.f32 %v390, 0.0
      %v429 = vadd.f32 %v394, 0.0
      %v430 = vadd.f32 %v398, 0.0
      %v431 = vmul.f32 %v399, 0.0051020407
      %v432 = vmul.f32 %v400, 0.0051020407
      %v433 = vmul.f32 %v401, 0.0051020407
      %v434 = vmul.f32 %v402, 0.0051020407
      %v435 = vmul.f32 %v403, 0.0051020407
      %v436 = vmul.f32 %v404, 0.0051020407
      %v437 = vmul.f32 %v405, 0.0051020407
      %v438 = vmul.f32 %v406, 0.0051020407
      %v439 = vmul.f32 %v407, 0.0051020407
      %v440 = vmul.f32 %v408, 0.0051020407
      %v441 = vmul.f32 %v409, 0.0051020407
      %v442 = vmul.f32 %v410, 0.0051020407
      %v443 = vmul.f32 %v411, 0.0051020407
      %v444 = vmul.f32 %v412, 0.0051020407
      %v445 = vmul.f32 %v413, 0.0051020407
      %v446 = vmul.f32 %v414, 0.0051020407
      %v447 = vmul.f32 %v415, 0.0051020407
      %v448 = vmul.f32 %v416, 0.0051020407
      %v449 = vmul.f32 %v417, 0.0051020407
      %v450 = vmul.f32 %v418, 0.0051020407
      %v451 = vmul.f32 %v419, 0.0051020407
      %v452 = vmul.f32 %v420, 0.0051020407
      %v453 = vmul.f32 %v421, 0.0051020407
      %v454 = vmul.f32 %v422, 0.0051020407
      %v455 = vmul.f32 %v423, 0.0051020407
      %v456 = vmul.f32 %v424, 0.0051020407
      %v457 = vmul.f32 %v425, 0.0051020407
      %v458 = vmul.f32 %v426, 0.0051020407
      %v459 = vmul.f32 %v427, 0.0051020407
      %v460 = vmul.f32 %v428, 0.0051020407
      %v461 = vmul.f32 %v429, 0.0051020407
      %v462 = vmul.f32 %v430, 0.0051020407
      %v463 = vsub.f32 %v206, %v431
      %v464 = vsub.f32 %v207, %v431
      %v465 = vsub.f32 %v208, %v432
      %v466 = vsub.f32 %v209, %v432
      %v467 = vsub.f32 %v210, %v433
      %v468 = vsub.f32 %v211, %v433
      %v469 = vsub.f32 %v212, %v434
      %v470 = vsub.f32 %v213, %v434
      %v471 = vsub.f32 %v214, %v435
      %v472 = vsub.f32 %v215, %v435
      %v473 = vsub.f32 %v216, %v436
      %v474 = vsub.f32 %v217, %v436
      %v475 = vsub.f32 %v218, %v437
      %v476 = vsub.f32 %v219, %v437
      %v477 = vsub.f32 %v220, %v438
      %v478 = vsub.f32 %v221, %v438
      %v479 = vsub.f32 %v222, %v439
      %v480 = vsub.f32 %v223, %v439
      %v481 = vsub.f32 %v224, %v440
      %v482 = vsub.f32 %v225, %v440
      %v483 = vsub.f32 %v226, %v441
      %v484 = vsub.f32 %v227, %v441
      %v485 = vsub.f32 %v228, %v442
      %v486 = vsub.f32 %v229, %v442
      %v487 = vsub.f32 %v230, %v443
      %v488 = vsub.f32 %v231, %v443
      %v489 = vsub.f32 %v232, %v444
      %v490 = vsub.f32 %v233, %v444
      %v491 = vsub.f32 %v234, %v445
      %v492 = vsub.f32 %v235, %v445
      %v493 = vsub.f32 %v236, %v446
      %v494 = vsub.f32 %v237, %v446
      %v495 = vsub.f32 %v238, %v447
      %v496 = vsub.f32 %v239, %v447
      %v497 = vsub.f32 %v240, %v448
      %v498 = vsub.f32 %v241, %v448
      %v499 = vsub.f32 %v242, %v449
      %v500 = vsub.f32 %v243, %v449
      %v501 = vsub.f32 %v244, %v450
      %v502 = vsub.f32 %v245, %v450
      %v503 = vsub.f32 %v246, %v451
      %v504 = vsub.f32 %v247, %v451
      %v505 = vsub.f32 %v248, %v452
      %v506 = vsub.f32 %v249, %v452
      %v507 = vsub.f32 %v250, %v453
      %v508 = vsub.f32 %v251, %v453
      %v509 = vsub.f32 %v252, %v454
      %v510 = vsub.f32 %v253, %v454
      %v511 = vsub.f32 %v254, %v455
      %v512 = vsub.f32 %v255, %v455
      %v513 = vsub.f32 %v256, %v456
      %v514 = vsub.f32 %v257, %v456
      %v515 = vsub.f32 %v258, %v457
      %v516 = vsub.f32 %v259, %v457
      %v517 = vsub.f32 %v260, %v458
      %v518 = vsub.f32 %v261, %v458
      %v519 = vsub.f32 %v262, %v459
      %v520 = vsub.f32 %v263, %v459
      %v521 = vsub.f32 %v264, %v460
      %v522 = vsub.f32 %v265, %v460
      %v523 = vsub.f32 %v266, %v461
      %v524 = vsub.f32 %v267, %v461
      %v525 = vsub.f32 %v268, %v462
      %v526 = vsub.f32 %v269, %v462
      %v527 = vmul.f32 %v463, %v463
      %v528 = vmul.f32 %v464, %v464
      %v529 = vmul.f32 %v465, %v465
      %v530 = vmul.f32 %v466, %v466
      %v531 = vmul.f32 %v467, %v467
      %v532 = vmul.f32 %v468, %v468
      %v533 = vmul.f32 %v469, %v469
      %v534 = vmul.f32 %v470, %v470
      %v535 = vmul.f32 %v471, %v471
      %v536 = vmul.f32 %v472, %v472
      %v537 = vmul.f32 %v473, %v473
      %v538 = vmul.f32 %v474, %v474
      %v539 = vmul.f32 %v475, %v475
      %v540 = vmul.f32 %v476, %v476
      %v541 = vmul.f32 %v477, %v477
      %v542 = vmul.f32 %v478, %v478
      %v543 = vmul.f32 %v479, %v479
      %v544 = vmul.f32 %v480, %v480
      %v545 = vmul.f32 %v481, %v481
      %v546 = vmul.f32 %v482, %v482
      %v547 = vmul.f32 %v483, %v483
      %v548 = vmul.f32 %v484, %v484
      %v549 = vmul.f32 %v485, %v485
      %v550 = vmul.f32 %v486, %v486
      %v551 = vmul.f32 %v487, %v487
      %v552 = vmul.f32 %v488, %v488
      %v553 = vmul.f32 %v489, %v489
      %v554 = vmul.f32 %v490, %v490
      %v555 = vmul.f32 %v491, %v491
      %v556 = vmul.f32 %v492, %v492
      %v557 = vmul.f32 %v493, %v493
      %v558 = vmul.f32 %v494, %v494
      %v559 = vmul.f32 %v495, %v495
      %v560 = vmul.f32 %v496, %v496
      %v561 = vmul.f32 %v497, %v497
      %v562 = vmul.f32 %v498, %v498
      %v563 = vmul.f32 %v499, %v499
      %v564 = vmul.f32 %v500, %v500
      %v565 = vmul.f32 %v501, %v501
      %v566 = vmul.f32 %v502, %v502
      %v567 = vmul.f32 %v503, %v503
      %v568 = vmul.f32 %v504, %v504
      %v569 = vmul.f32 %v505, %v505
      %v570 = vmul.f32 %v506, %v506
      %v571 = vmul.f32 %v507, %v507
      %v572 = vmul.f32 %v508, %v508
      %v573 = vmul.f32 %v509, %v509
      %v574 = vmul.f32 %v510, %v510
      %v575 = vmul.f32 %v511, %v511
      %v576 = vmul.f32 %v512, %v512
      %v577 = vmul.f32 %v513, %v513
      %v578 = vmul.f32 %v514, %v514
      %v579 = vmul.f32 %v515, %v515
      %v580 = vmul.f32 %v516, %v516
      %v581 = vmul.f32 %v517, %v517
      %v582 = vmul.f32 %v518, %v518
      %v583 = vmul.f32 %v519, %v519
      %v584 = vmul.f32 %v520, %v520
      %v585 = vmul.f32 %v521, %v521
      %v586 = vmul.f32 %v522, %v522
      %v587 = vmul.f32 %v523, %v523
      %v588 = vmul.f32 %v524, %v524
      %v589 = vmul.f32 %v525, %v525
      %v590 = vmul.f32 %v526, %v526
      %v591 = vsel %vm270, %v528, 0.0
      %v592 = vadd.f32 %v527, %v591
      %593 = vadd.xlane.f32.xlu0 %v592
      %v594 = vpop.xlane.xlu0 %593
      %v595 = vsel %vm270, %v530, 0.0
      %v596 = vadd.f32 %v529, %v595
      %597 = vadd.xlane.f32.xlu0 %v596
      %v598 = vpop.xlane.xlu0 %597
      %v599 = vsel %vm270, %v532, 0.0
      %v600 = vadd.f32 %v531, %v599
      %601 = vadd.xlane.f32.xlu0 %v600
      %v602 = vpop.xlane.xlu0 %601
      %v603 = vsel %vm270, %v534, 0.0
      %v604 = vadd.f32 %v533, %v603
      %605 = vadd.xlane.f32.xlu0 %v604
      %v606 = vpop.xlane.xlu0 %605
      %v607 = vsel %vm270, %v536, 0.0
      %v608 = vadd.f32 %v535, %v607
      %609 = vadd.xlane.f32.xlu0 %v608
      %v610 = vpop.xlane.xlu0 %609
      %v611 = vsel %vm270, %v538, 0.0
      %v612 = vadd.f32 %v537, %v611
      %613 = vadd.xlane.f32.xlu0 %v612
      %v614 = vpop.xlane.xlu0 %613
      %v615 = vsel %vm270, %v540, 0.0
      %v616 = vadd.f32 %v539, %v615
      %617 = vadd.xlane.f32.xlu0 %v616
      %v618 = vpop.xlane.xlu0 %617
      %v619 = vsel %vm270, %v542, 0.0
      %v620 = vadd.f32 %v541, %v619
      %621 = vadd.xlane.f32.xlu0 %v620
      %v622 = vpop.xlane.xlu0 %621
      %v623 = vsel %vm270, %v544, 0.0
      %v624 = vadd.f32 %v543, %v623
      %625 = vadd.xlane.f32.xlu0 %v624
      %v626 = vpop.xlane.xlu0 %625
      %v627 = vsel %vm270, %v546, 0.0
      %v628 = vadd.f32 %v545, %v627
      %629 = vadd.xlane.f32.xlu0 %v628
      %v630 = vpop.xlane.xlu0 %629
      %v631 = vsel %vm270, %v548, 0.0
      %v632 = vadd.f32 %v547, %v631
      %633 = vadd.xlane.f32.xlu0 %v632
      %v634 = vpop.xlane.xlu0 %633
      %v635 = vsel %vm270, %v550, 0.0
      %v636 = vadd.f32 %v549, %v635
      %637 = vadd.xlane.f32.xlu0 %v636
      %v638 = vpop.xlane.xlu0 %637
      %v639 = vsel %vm270, %v552, 0.0
      %v640 = vadd.f32 %v551, %v639
      %641 = vadd.xlane.f32.xlu0 %v640
      %v642 = vpop.xlane.xlu0 %641
      %v643 = vsel %vm270, %v554, 0.0
      %v644 = vadd.f32 %v553, %v643
      %645 = vadd.xlane.f32.xlu0 %v644
      %v646 = vpop.xlane.xlu0 %645
      %v647 = vsel %vm270, %v556, 0.0
      %v648 = vadd.f32 %v555, %v647
      %649 = vadd.xlane.f32.xlu0 %v648
      %v650 = vpop.xlane.xlu0 %649
      %v651 = vsel %vm270, %v558, 0.0
      %v652 = vadd.f32 %v557, %v651
      %653 = vadd.xlane.f32.xlu0 %v652
      %v654 = vpop.xlane.xlu0 %653
      %v655 = vsel %vm270, %v560, 0.0
      %v656 = vadd.f32 %v559, %v655
      %657 = vadd.xlane.f32.xlu0 %v656
      %v658 = vpop.xlane.xlu0 %657
      %v659 = vsel %vm270, %v562, 0.0
      %v660 = vadd.f32 %v561, %v659
      %661 = vadd.xlane.f32.xlu0 %v660
      %v662 = vpop.xlane.xlu0 %661
      %v663 = vsel %vm270, %v564, 0.0
      %v664 = vadd.f32 %v563, %v663
      %665 = vadd.xlane.f32.xlu0 %v664
      %v666 = vpop.xlane.xlu0 %665
      %v667 = vsel %vm270, %v566, 0.0
      %v668 = vadd.f32 %v565, %v667
      %669 = vadd.xlane.f32.xlu0 %v668
      %v670 = vpop.xlane.xlu0 %669
      %v671 = vsel %vm270, %v568, 0.0
      %v672 = vadd.f32 %v567, %v671
      %673 = vadd.xlane.f32.xlu0 %v672
      %v674 = vpop.xlane.xlu0 %673
      %v675 = vsel %vm270, %v570, 0.0
      %v676 = vadd.f32 %v569, %v675
      %677 = vadd.xlane.f32.xlu0 %v676
      %v678 = vpop.xlane.xlu0 %677
      %v679 = vsel %vm270, %v572, 0.0
      %v680 = vadd.f32 %v571, %v679
      %681 = vadd.xlane.f32.xlu0 %v680
      %v682 = vpop.xlane.xlu0 %681
      %v683 = vsel %vm270, %v574, 0.0
      %v684 = vadd.f32 %v573, %v683
      %685 = vadd.xlane.f32.xlu0 %v684
      %v686 = vpop.xlane.xlu0 %685
      %v687 = vsel %vm270, %v576, 0.0
      %v688 = vadd.f32 %v575, %v687
      %689 = vadd.xlane.f32.xlu0 %v688
      %v690 = vpop.xlane.xlu0 %689
      %v691 = vsel %vm270, %v578, 0.0
      %v692 = vadd.f32 %v577, %v691
      %693 = vadd.xlane.f32.xlu0 %v692
      %v694 = vpop.xlane.xlu0 %693
      %v695 = vsel %vm270, %v580, 0.0
      %v696 = vadd.f32 %v579, %v695
      %697 = vadd.xlane.f32.xlu0 %v696
      %v698 = vpop.xlane.xlu0 %697
      %v699 = vsel %vm270, %v582, 0.0
      %v700 = vadd.f32 %v581, %v699
      %701 = vadd.xlane.f32.xlu0 %v700
      %v702 = vpop.xlane.xlu0 %701
      %v703 = vsel %vm270, %v584, 0.0
      %v704 = vadd.f32 %v583, %v703
      %705 = vadd.xlane.f32.xlu0 %v704
      %v706 = vpop.xlane.xlu0 %705
      %v707 = vsel %vm270, %v586, 0.0
      %v708 = vadd.f32 %v585, %v707
      %709 = vadd.xlane.f32.xlu0 %v708
      %v710 = vpop.xlane.xlu0 %709
      %v711 = vsel %vm270, %v588, 0.0
      %v712 = vadd.f32 %v587, %v711
      %713 = vadd.xlane.f32.xlu0 %v712
      %v714 = vpop.xlane.xlu0 %713
      %v715 = vsel %vm270, %v590, 0.0
      %v716 = vadd.f32 %v589, %v715
      %717 = vadd.xlane.f32.xlu0 %v716
      %v718 = vpop.xlane.xlu0 %717
      %v719 = vadd.f32 %v594, 0.0
      %v720 = vadd.f32 %v598, 0.0
      %v721 = vadd.f32 %v602, 0.0
      %v722 = vadd.f32 %v606, 0.0
      %v723 = vadd.f32 %v610, 0.0
      %v724 = vadd.f32 %v614, 0.0
      %v725 = vadd.f32 %v618, 0.0
      %v726 = vadd.f32 %v622, 0.0
      %v727 = vadd.f32 %v626, 0.0
      %v728 = vadd.f32 %v630, 0.0
      %v729 = vadd.f32 %v634, 0.0
      %v730 = vadd.f32 %v638, 0.0
      %v731 = vadd.f32 %v642, 0.0
      %v732 = vadd.f32 %v646, 0.0
      %v733 = vadd.f32 %v650, 0.0
      %v734 = vadd.f32 %v654, 0.0
      %v735 = vadd.f32 %v658, 0.0
      %v736 = vadd.f32 %v662, 0.0
      %v737 = vadd.f32 %v666, 0.0
      %v738 = vadd.f32 %v670, 0.0
      %v739 = vadd.f32 %v674, 0.0
      %v740 = vadd.f32 %v678, 0.0
      %v741 = vadd.f32 %v682, 0.0
      %v742 = vadd.f32 %v686, 0.0
      %v743 = vadd.f32 %v690, 0.0
      %v744 = vadd.f32 %v694, 0.0
      %v745 = vadd.f32 %v698, 0.0
      %v746 = vadd.f32 %v702, 0.0
      %v747 = vadd.f32 %v706, 0.0
      %v748 = vadd.f32 %v710, 0.0
      %v749 = vadd.f32 %v714, 0.0
      %v750 = vadd.f32 %v718, 0.0
      %v751 = vmul.f32 %v719, 0.0051020407
      %v752 = vmul.f32 %v720, 0.0051020407
      %v753 = vmul.f32 %v721, 0.0051020407
      %v754 = vmul.f32 %v722, 0.0051020407
      %v755 = vmul.f32 %v723, 0.0051020407
      %v756 = vmul.f32 %v724, 0.0051020407
      %v757 = vmul.f32 %v725, 0.0051020407
      %v758 = vmul.f32 %v726, 0.0051020407
      %v759 = vmul.f32 %v727, 0.0051020407
      %v760 = vmul.f32 %v728, 0.0051020407
      %v761 = vmul.f32 %v729, 0.0051020407
      %v762 = vmul.f32 %v730, 0.0051020407
      %v763 = vmul.f32 %v731, 0.0051020407
      %v764 = vmul.f32 %v732, 0.0051020407
      %v765 = vmul.f32 %v733, 0.0051020407
      %v766 = vmul.f32 %v734, 0.0051020407
      %v767 = vmul.f32 %v735, 0.0051020407
      %v768 = vmul.f32 %v736, 0.0051020407
      %v769 = vmul.f32 %v737, 0.0051020407
      %v770 = vmul.f32 %v738, 0.0051020407
      %v771 = vmul.f32 %v739, 0.0051020407
      %v772 = vmul.f32 %v740, 0.0051020407
      %v773 = vmul.f32 %v741, 0.0051020407
      %v774 = vmul.f32 %v742, 0.0051020407
      %v775 = vmul.f32 %v743, 0.0051020407
      %v776 = vmul.f32 %v744, 0.0051020407
      %v777 = vmul.f32 %v745, 0.0051020407
      %v778 = vmul.f32 %v746, 0.0051020407
      %v779 = vmul.f32 %v747, 0.0051020407
      %v780 = vmul.f32 %v748, 0.0051020407
      %v781 = vmul.f32 %v749, 0.0051020407
      %v782 = vmul.f32 %v750, 0.0051020407
      %v783 = vadd.f32 %v751, 1e-05
      %v784 = vadd.f32 %v752, 1e-05
      %v785 = vadd.f32 %v753, 1e-05
      %v786 = vadd.f32 %v754, 1e-05
      %v787 = vadd.f32 %v755, 1e-05
      %v788 = vadd.f32 %v756, 1e-05
      %v789 = vadd.f32 %v757, 1e-05
      %v790 = vadd.f32 %v758, 1e-05
      %v791 = vadd.f32 %v759, 1e-05
      %v792 = vadd.f32 %v760, 1e-05
      %v793 = vadd.f32 %v761, 1e-05
      %v794 = vadd.f32 %v762, 1e-05
      %v795 = vadd.f32 %v763, 1e-05
      %v796 = vadd.f32 %v764, 1e-05
      %v797 = vadd.f32 %v765, 1e-05
      %v798 = vadd.f32 %v766, 1e-05
      %v799 = vadd.f32 %v767, 1e-05
      %v800 = vadd.f32 %v768, 1e-05
      %v801 = vadd.f32 %v769, 1e-05
      %v802 = vadd.f32 %v770, 1e-05
      %v803 = vadd.f32 %v771, 1e-05
      %v804 = vadd.f32 %v772, 1e-05
      %v805 = vadd.f32 %v773, 1e-05
      %v806 = vadd.f32 %v774, 1e-05
      %v807 = vadd.f32 %v775, 1e-05
      %v808 = vadd.f32 %v776, 1e-05
      %v809 = vadd.f32 %v777, 1e-05
      %v810 = vadd.f32 %v778, 1e-05
      %v811 = vadd.f32 %v779, 1e-05
      %v812 = vadd.f32 %v780, 1e-05
      %v813 = vadd.f32 %v781, 1e-05
      %v814 = vadd.f32 %v782, 1e-05
      %v815 = vrsqrt.pop %v783
      %v816 = vrsqrt.pop %v784
      %v817 = vrsqrt.pop %v785
      %v818 = vrsqrt.pop %v786
      %v819 = vrsqrt.pop %v787
      %v820 = vrsqrt.pop %v788
      %v821 = vrsqrt.pop %v789
      %v822 = vrsqrt.pop %v790
      %v823 = vrsqrt.pop %v791
      %v824 = vrsqrt.pop %v792
      %v825 = vrsqrt.pop %v793
      %v826 = vrsqrt.pop %v794
      %v827 = vrsqrt.pop %v795
      %v828 = vrsqrt.pop %v796
      %v829 = vrsqrt.pop %v797
      %v830 = vrsqrt.pop %v798
      %v831 = vrsqrt.pop %v799
      %v832 = vrsqrt.pop %v800
      %v833 = vrsqrt.pop %v801
      %v834 = vrsqrt.pop %v802
      %v835 = vrsqrt.pop %v803
      %v836 = vrsqrt.pop %v804
      %v837 = vrsqrt.pop %v805
      %v838 = vrsqrt.pop %v806
      %v839 = vrsqrt.pop %v807
      %v840 = vrsqrt.pop %v808
      %v841 = vrsqrt.pop %v809
      %v842 = vrsqrt.pop %v810
      %v843 = vrsqrt.pop %v811
      %v844 = vrsqrt.pop %v812
      %v845 = vrsqrt.pop %v813
      %v846 = vrsqrt.pop %v814
      %v847 = vld [vmem:[%s1] sm:$0xff]
      %v848 = vld [vmem:[%s1 + $0x8] sm:$0xff]
      %v849 = vld [vmem:[%s1 + $0x10] sm:$0xff]
      %v850 = vld [vmem:[%s1 + $0x18] sm:$0xff]
      %v851 = vld [vmem:[%s1 + $0x20] sm:$0xff]
      %v852 = vld [vmem:[%s1 + $0x28] sm:$0xff]
      %v853 = vld [vmem:[%s1 + $0x30] sm:$0xff]
      %v854 = vld [vmem:[%s1 + $0x38] sm:$0xff]
      %v855 = vld [vmem:[%s1 + $0x40] sm:$0xff]
      %v856 = vld [vmem:[%s1 + $0x48] sm:$0xff]
      %v857 = vld [vmem:[%s1 + $0x50] sm:$0xff]
      %v858 = vld [vmem:[%s1 + $0x58] sm:$0xff]
      %v859 = vld [vmem:[%s1 + $0x60] sm:$0xff]
      %v860 = vld [vmem:[%s1 + $0x68] sm:$0xff]
      %v861 = vld [vmem:[%s1 + $0x70] sm:$0xff]
      %v862 = vld [vmem:[%s1 + $0x78] sm:$0xff]
      %v863 = vld [vmem:[%s1 + $0x80] sm:$0xff]
      %v864 = vld [vmem:[%s1 + $0x88] sm:$0xff]
      %v865 = vld [vmem:[%s1 + $0x90] sm:$0xff]
      %v866 = vld [vmem:[%s1 + $0x98] sm:$0xff]
      %v867 = vld [vmem:[%s1 + $0xa0] sm:$0xff]
      %v868 = vld [vmem:[%s1 + $0xa8] sm:$0xff]
      %v869 = vld [vmem:[%s1 + $0xb0] sm:$0xff]
      %v870 = vld [vmem:[%s1 + $0xb8] sm:$0xff]
      %v871 = vld [vmem:[%s1 + $0xc0] sm:$0xff]
      %v872 = vld [vmem:[%s1 + $0xc8] sm:$0xff]
      %v873 = vld [vmem:[%s1 + $0xd0] sm:$0xff]
      %v874 = vld [vmem:[%s1 + $0xd8] sm:$0xff]
      %v875 = vld [vmem:[%s1 + $0xe0] sm:$0xff]
      %v876 = vld [vmem:[%s1 + $0xe8] sm:$0xff]
      %v877 = vld [vmem:[%s1 + $0xf0] sm:$0xff]
      %v878 = vld [vmem:[%s1 + $0xf8] sm:$0xff]
      %v879 = vld [vmem:[%s2] sm:$0xff]
      %v880 = vld [vmem:[%s2 + $0x8] sm:$0xff]
      %v881 = vld [vmem:[%s2 + $0x10] sm:$0xff]
      %v882 = vld [vmem:[%s2 + $0x18] sm:$0xff]
      %v883 = vld [vmem:[%s2 + $0x20] sm:$0xff]
      %v884 = vld [vmem:[%s2 + $0x28] sm:$0xff]
      %v885 = vld [vmem:[%s2 + $0x30] sm:$0xff]
      %v886 = vld [vmem:[%s2 + $0x38] sm:$0xff]
      %v887 = vld [vmem:[%s2 + $0x40] sm:$0xff]
      %v888 = vld [vmem:[%s2 + $0x48] sm:$0xff]
      %v889 = vld [vmem:[%s2 + $0x50] sm:$0xff]
      %v890 = vld [vmem:[%s2 + $0x58] sm:$0xff]
      %v891 = vld [vmem:[%s2 + $0x60] sm:$0xff]
      %v892 = vld [vmem:[%s2 + $0x68] sm:$0xff]
      %v893 = vld [vmem:[%s2 + $0x70] sm:$0xff]
      %v894 = vld [vmem:[%s2 + $0x78] sm:$0xff]
      %v895 = vld [vmem:[%s2 + $0x80] sm:$0xff]
      %v896 = vld [vmem:[%s2 + $0x88] sm:$0xff]
      %v897 = vld [vmem:[%s2 + $0x90] sm:$0xff]
      %v898 = vld [vmem:[%s2 + $0x98] sm:$0xff]
      %v899 = vld [vmem:[%s2 + $0xa0] sm:$0xff]
      %v900 = vld [vmem:[%s2 + $0xa8] sm:$0xff]
      %v901 = vld [vmem:[%s2 + $0xb0] sm:$0xff]
      %v902 = vld [vmem:[%s2 + $0xb8] sm:$0xff]
      %v903 = vld [vmem:[%s2 + $0xc0] sm:$0xff]
      %v904 = vld [vmem:[%s2 + $0xc8] sm:$0xff]
      %v905 = vld [vmem:[%s2 + $0xd0] sm:$0xff]
      %v906 = vld [vmem:[%s2 + $0xd8] sm:$0xff]
      %v907 = vld [vmem:[%s2 + $0xe0] sm:$0xff]
      %v908 = vld [vmem:[%s2 + $0xe8] sm:$0xff]
      %v909 = vld [vmem:[%s2 + $0xf0] sm:$0xff]
      %v910 = vld [vmem:[%s2 + $0xf8] sm:$0xff]
      %v911 = vmul.f32 %v847, %v815
      %v912 = vmul.f32 %v848, %v816
      %v913 = vmul.f32 %v849, %v817
      %v914 = vmul.f32 %v850, %v818
      %v915 = vmul.f32 %v851, %v819
      %v916 = vmul.f32 %v852, %v820
      %v917 = vmul.f32 %v853, %v821
      %v918 = vmul.f32 %v854, %v822
      %v919 = vmul.f32 %v855, %v823
      %v920 = vmul.f32 %v856, %v824
      %v921 = vmul.f32 %v857, %v825
      %v922 = vmul.f32 %v858, %v826
      %v923 = vmul.f32 %v859, %v827
      %v924 = vmul.f32 %v860, %v828
      %v925 = vmul.f32 %v861, %v829
      %v926 = vmul.f32 %v862, %v830
      %v927 = vmul.f32 %v863, %v831
      %v928 = vmul.f32 %v864, %v832
      %v929 = vmul.f32 %v865, %v833
      %v930 = vmul.f32 %v866, %v834
      %v931 = vmul.f32 %v867, %v835
      %v932 = vmul.f32 %v868, %v836
      %v933 = vmul.f32 %v869, %v837
      %v934 = vmul.f32 %v870, %v838
      %v935 = vmul.f32 %v871, %v839
      %v936 = vmul.f32 %v872, %v840
      %v937 = vmul.f32 %v873, %v841
      %v938 = vmul.f32 %v874, %v842
      %v939 = vmul.f32 %v875, %v843
      %v940 = vmul.f32 %v876, %v844
      %v941 = vmul.f32 %v877, %v845
      %v942 = vmul.f32 %v878, %v846
      %v943 = vmul.f32 %v431, %v911
      %v944 = vmul.f32 %v432, %v912
      %v945 = vmul.f32 %v433, %v913
      %v946 = vmul.f32 %v434, %v914
      %v947 = vmul.f32 %v435, %v915
      %v948 = vmul.f32 %v436, %v916
      %v949 = vmul.f32 %v437, %v917
      %v950 = vmul.f32 %v438, %v918
      %v951 = vmul.f32 %v439, %v919
      %v952 = vmul.f32 %v440, %v920
      %v953 = vmul.f32 %v441, %v921
      %v954 = vmul.f32 %v442, %v922
      %v955 = vmul.f32 %v443, %v923
      %v956 = vmul.f32 %v444, %v924
      %v957 = vmul.f32 %v445, %v925
      %v958 = vmul.f32 %v446, %v926
      %v959 = vmul.f32 %v447, %v927
      %v960 = vmul.f32 %v448, %v928
      %v961 = vmul.f32 %v449, %v929
      %v962 = vmul.f32 %v450, %v930
      %v963 = vmul.f32 %v451, %v931
      %v964 = vmul.f32 %v452, %v932
      %v965 = vmul.f32 %v453, %v933
      %v966 = vmul.f32 %v454, %v934
      %v967 = vmul.f32 %v455, %v935
      %v968 = vmul.f32 %v456, %v936
      %v969 = vmul.f32 %v457, %v937
      %v970 = vmul.f32 %v458, %v938
      %v971 = vmul.f32 %v459, %v939
      %v972 = vmul.f32 %v460, %v940
      %v973 = vmul.f32 %v461, %v941
      %v974 = vmul.f32 %v462, %v942
      %v975 = vsub.f32 %v879, %v943
      %v976 = vsub.f32 %v880, %v944
      %v977 = vsub.f32 %v881, %v945
      %v978 = vsub.f32 %v882, %v946
      %v979 = vsub.f32 %v883, %v947
      %v980 = vsub.f32 %v884, %v948
      %v981 = vsub.f32 %v885, %v949
      %v982 = vsub.f32 %v886, %v950
      %v983 = vsub.f32 %v887, %v951
      %v984 = vsub.f32 %v888, %v952
      %v985 = vsub.f32 %v889, %v953
      %v986 = vsub.f32 %v890, %v954
      %v987 = vsub.f32 %v891, %v955
      %v988 = vsub.f32 %v892, %v956
      %v989 = vsub.f32 %v893, %v957
      %v990 = vsub.f32 %v894, %v958
      %v991 = vsub.f32 %v895, %v959
      %v992 = vsub.f32 %v896, %v960
      %v993 = vsub.f32 %v897, %v961
      %v994 = vsub.f32 %v898, %v962
      %v995 = vsub.f32 %v899, %v963
      %v996 = vsub.f32 %v900, %v964
      %v997 = vsub.f32 %v901, %v965
      %v998 = vsub.f32 %v902, %v966
      %v999 = vsub.f32 %v903, %v967
      %v1000 = vsub.f32 %v904, %v968
      %v1001 = vsub.f32 %v905, %v969
      %v1002 = vsub.f32 %v906, %v970
      %v1003 = vsub.f32 %v907, %v971
      %v1004 = vsub.f32 %v908, %v972
      %v1005 = vsub.f32 %v909, %v973
      %v1006 = vsub.f32 %v910, %v974
      %1008 = vset.pattern.permute.xlu0 0
      %1009 = vperm.xlu0 %1008, %v911
      %v1010 = vpop.permute.xlu0 %1009
      %1013 = vset.pattern.permute.xlu0 0
      %1014 = vperm.xlu0 %1013, %v912
      %v1015 = vpop.permute.xlu0 %1014
      %1018 = vset.pattern.permute.xlu0 0
      %1019 = vperm.xlu0 %1018, %v913
      %v1020 = vpop.permute.xlu0 %1019
      %1023 = vset.pattern.permute.xlu0 0
      %1024 = vperm.xlu0 %1023, %v914
      %v1025 = vpop.permute.xlu0 %1024
      %1028 = vset.pattern.permute.xlu0 0
      %1029 = vperm.xlu0 %1028, %v915
      %v1030 = vpop.permute.xlu0 %1029
      %1033 = vset.pattern.permute.xlu0 0
      %1034 = vperm.xlu0 %1033, %v916
      %v1035 = vpop.permute.xlu0 %1034
      %1038 = vset.pattern.permute.xlu0 0
      %1039 = vperm.xlu0 %1038, %v917
      %v1040 = vpop.permute.xlu0 %1039
      %1043 = vset.pattern.permute.xlu0 0
      %1044 = vperm.xlu0 %1043, %v918
      %v1045 = vpop.permute.xlu0 %1044
      %1048 = vset.pattern.permute.xlu0 0
      %1049 = vperm.xlu0 %1048, %v919
      %v1050 = vpop.permute.xlu0 %1049
      %1053 = vset.pattern.permute.xlu0 0
      %1054 = vperm.xlu0 %1053, %v920
      %v1055 = vpop.permute.xlu0 %1054
      %1058 = vset.pattern.permute.xlu0 0
      %1059 = vperm.xlu0 %1058, %v921
      %v1060 = vpop.permute.xlu0 %1059
      %1063 = vset.pattern.permute.xlu0 0
      %1064 = vperm.xlu0 %1063, %v922
      %v1065 = vpop.permute.xlu0 %1064
      %1068 = vset.pattern.permute.xlu0 0
      %1069 = vperm.xlu0 %1068, %v923
      %v1070 = vpop.permute.xlu0 %1069
      %1073 = vset.pattern.permute.xlu0 0
      %1074 = vperm.xlu0 %1073, %v924
      %v1075 = vpop.permute.xlu0 %1074
      %1078 = vset.pattern.permute.xlu0 0
      %1079 = vperm.xlu0 %1078, %v925
      %v1080 = vpop.permute.xlu0 %1079
      %1083 = vset.pattern.permute.xlu0 0
      %1084 = vperm.xlu0 %1083, %v926
      %v1085 = vpop.permute.xlu0 %1084
      %1088 = vset.pattern.permute.xlu0 0
      %1089 = vperm.xlu0 %1088, %v927
      %v1090 = vpop.permute.xlu0 %1089
      %1093 = vset.pattern.permute.xlu0 0
      %1094 = vperm.xlu0 %1093, %v928
      %v1095 = vpop.permute.xlu0 %1094
      %1098 = vset.pattern.permute.xlu0 0
      %1099 = vperm.xlu0 %1098, %v929
      %v1100 = vpop.permute.xlu0 %1099
      %1103 = vset.pattern.permute.xlu0 0
      %1104 = vperm.xlu0 %1103, %v930
      %v1105 = vpop.permute.xlu0 %1104
      %1108 = vset.pattern.permute.xlu0 0
      %1109 = vperm.xlu0 %1108, %v931
      %v1110 = vpop.permute.xlu0 %1109
      %1113 = vset.pattern.permute.xlu0 0
      %1114 = vperm.xlu0 %1113, %v932
      %v1115 = vpop.permute.xlu0 %1114
      %1118 = vset.pattern.permute.xlu0 0
      %1119 = vperm.xlu0 %1118, %v933
      %v1120 = vpop.permute.xlu0 %1119
      %1123 = vset.pattern.permute.xlu0 0
      %1124 = vperm.xlu0 %1123, %v934
      %v1125 = vpop.permute.xlu0 %1124
      %1128 = vset.pattern.permute.xlu0 0
      %1129 = vperm.xlu0 %1128, %v935
      %v1130 = vpop.permute.xlu0 %1129
      %1133 = vset.pattern.permute.xlu0 0
      %1134 = vperm.xlu0 %1133, %v936
      %v1135 = vpop.permute.xlu0 %1134
      %1138 = vset.pattern.permute.xlu0 0
      %1139 = vperm.xlu0 %1138, %v937
      %v1140 = vpop.permute.xlu0 %1139
      %1143 = vset.pattern.permute.xlu0 0
      %1144 = vperm.xlu0 %1143, %v938
      %v1145 = vpop.permute.xlu0 %1144
      %1148 = vset.pattern.permute.xlu0 0
      %1149 = vperm.xlu0 %1148, %v939
      %v1150 = vpop.permute.xlu0 %1149
      %1153 = vset.pattern.permute.xlu0 0
      %1154 = vperm.xlu0 %1153, %v940
      %v1155 = vpop.permute.xlu0 %1154
      %1158 = vset.pattern.permute.xlu0 0
      %1159 = vperm.xlu0 %1158, %v941
      %v1160 = vpop.permute.xlu0 %1159
      %1163 = vset.pattern.permute.xlu0 0
      %1164 = vperm.xlu0 %1163, %v942
      %v1165 = vpop.permute.xlu0 %1164
      %v1167 = vmul.f32 %v206, %v1010
      %v1168 = vmul.f32 %v207, %v1010
      %v1169 = vmul.f32 %v208, %v1015
      %v1170 = vmul.f32 %v209, %v1015
      %v1171 = vmul.f32 %v210, %v1020
      %v1172 = vmul.f32 %v211, %v1020
      %v1173 = vmul.f32 %v212, %v1025
      %v1174 = vmul.f32 %v213, %v1025
      %v1175 = vmul.f32 %v214, %v1030
      %v1176 = vmul.f32 %v215, %v1030
      %v1177 = vmul.f32 %v216, %v1035
      %v1178 = vmul.f32 %v217, %v1035
      %v1179 = vmul.f32 %v218, %v1040
      %v1180 = vmul.f32 %v219, %v1040
      %v1181 = vmul.f32 %v220, %v1045
      %v1182 = vmul.f32 %v221, %v1045
      %v1183 = vmul.f32 %v222, %v1050
      %v1184 = vmul.f32 %v223, %v1050
      %v1185 = vmul.f32 %v224, %v1055
      %v1186 = vmul.f32 %v225, %v1055
      %v1187 = vmul.f32 %v226, %v1060
      %v1188 = vmul.f32 %v227, %v1060
      %v1189 = vmul.f32 %v228, %v1065
      %v1190 = vmul.f32 %v229, %v1065
      %v1191 = vmul.f32 %v230, %v1070
      %v1192 = vmul.f32 %v231, %v1070
      %v1193 = vmul.f32 %v232, %v1075
      %v1194 = vmul.f32 %v233, %v1075
      %v1195 = vmul.f32 %v234, %v1080
      %v1196 = vmul.f32 %v235, %v1080
      %v1197 = vmul.f32 %v236, %v1085
      %v1198 = vmul.f32 %v237, %v1085
      %v1199 = vmul.f32 %v238, %v1090
      %v1200 = vmul.f32 %v239, %v1090
      %v1201 = vmul.f32 %v240, %v1095
      %v1202 = vmul.f32 %v241, %v1095
      %v1203 = vmul.f32 %v242, %v1100
      %v1204 = vmul.f32 %v243, %v1100
      %v1205 = vmul.f32 %v244, %v1105
      %v1206 = vmul.f32 %v245, %v1105
      %v1207 = vmul.f32 %v246, %v1110
      %v1208 = vmul.f32 %v247, %v1110
      %v1209 = vmul.f32 %v248, %v1115
      %v1210 = vmul.f32 %v249, %v1115
      %v1211 = vmul.f32 %v250, %v1120
      %v1212 = vmul.f32 %v251, %v1120
      %v1213 = vmul.f32 %v252, %v1125
      %v1214 = vmul.f32 %v253, %v1125
      %v1215 = vmul.f32 %v254, %v1130
      %v1216 = vmul.f32 %v255, %v1130
      %v1217 = vmul.f32 %v256, %v1135
      %v1218 = vmul.f32 %v257, %v1135
      %v1219 = vmul.f32 %v258, %v1140
      %v1220 = vmul.f32 %v259, %v1140
      %v1221 = vmul.f32 %v260, %v1145
      %v1222 = vmul.f32 %v261, %v1145
      %v1223 = vmul.f32 %v262, %v1150
      %v1224 = vmul.f32 %v263, %v1150
      %v1225 = vmul.f32 %v264, %v1155
      %v1226 = vmul.f32 %v265, %v1155
      %v1227 = vmul.f32 %v266, %v1160
      %v1228 = vmul.f32 %v267, %v1160
      %v1229 = vmul.f32 %v268, %v1165
      %v1230 = vmul.f32 %v269, %v1165
      %1232 = vset.pattern.permute.xlu0 0
      %1233 = vperm.xlu0 %1232, %v975
      %v1234 = vpop.permute.xlu0 %1233
      %1237 = vset.pattern.permute.xlu0 0
      %1238 = vperm.xlu0 %1237, %v976
      %v1239 = vpop.permute.xlu0 %1238
      %1242 = vset.pattern.permute.xlu0 0
      %1243 = vperm.xlu0 %1242, %v977
      %v1244 = vpop.permute.xlu0 %1243
      %1247 = vset.pattern.permute.xlu0 0
      %1248 = vperm.xlu0 %1247, %v978
      %v1249 = vpop.permute.xlu0 %1248
      %1252 = vset.pattern.permute.xlu0 0
      %1253 = vperm.xlu0 %1252, %v979
      %v1254 = vpop.permute.xlu0 %1253
      %1257 = vset.pattern.permute.xlu0 0
      %1258 = vperm.xlu0 %1257, %v980
      %v1259 = vpop.permute.xlu0 %1258
      %1262 = vset.pattern.permute.xlu0 0
      %1263 = vperm.xlu0 %1262, %v981
      %v1264 = vpop.permute.xlu0 %1263
      %1267 = vset.pattern.permute.xlu0 0
      %1268 = vperm.xlu0 %1267, %v982
      %v1269 = vpop.permute.xlu0 %1268
      %1272 = vset.pattern.permute.xlu0 0
      %1273 = vperm.xlu0 %1272, %v983
      %v1274 = vpop.permute.xlu0 %1273
      %1277 = vset.pattern.permute.xlu0 0
      %1278 = vperm.xlu0 %1277, %v984
      %v1279 = vpop.permute.xlu0 %1278
      %1282 = vset.pattern.permute.xlu0 0
      %1283 = vperm.xlu0 %1282, %v985
      %v1284 = vpop.permute.xlu0 %1283
      %1287 = vset.pattern.permute.xlu0 0
      %1288 = vperm.xlu0 %1287, %v986
      %v1289 = vpop.permute.xlu0 %1288
      %1292 = vset.pattern.permute.xlu0 0
      %1293 = vperm.xlu0 %1292, %v987
      %v1294 = vpop.permute.xlu0 %1293
      %1297 = vset.pattern.permute.xlu0 0
      %1298 = vperm.xlu0 %1297, %v988
      %v1299 = vpop.permute.xlu0 %1298
      %1302 = vset.pattern.permute.xlu0 0
      %1303 = vperm.xlu0 %1302, %v989
      %v1304 = vpop.permute.xlu0 %1303
      %1307 = vset.pattern.permute.xlu0 0
      %1308 = vperm.xlu0 %1307, %v990
      %v1309 = vpop.permute.xlu0 %1308
      %1312 = vset.pattern.permute.xlu0 0
      %1313 = vperm.xlu0 %1312, %v991
      %v1314 = vpop.permute.xlu0 %1313
      %1317 = vset.pattern.permute.xlu0 0
      %1318 = vperm.xlu0 %1317, %v992
      %v1319 = vpop.permute.xlu0 %1318
      %1322 = vset.pattern.permute.xlu0 0
      %1323 = vperm.xlu0 %1322, %v993
      %v1324 = vpop.permute.xlu0 %1323
      %1327 = vset.pattern.permute.xlu0 0
      %1328 = vperm.xlu0 %1327, %v994
      %v1329 = vpop.permute.xlu0 %1328
      %1332 = vset.pattern.permute.xlu0 0
      %1333 = vperm.xlu0 %1332, %v995
      %v1334 = vpop.permute.xlu0 %1333
      %1337 = vset.pattern.permute.xlu0 0
      %1338 = vperm.xlu0 %1337, %v996
      %v1339 = vpop.permute.xlu0 %1338
      %1342 = vset.pattern.permute.xlu0 0
      %1343 = vperm.xlu0 %1342, %v997
      %v1344 = vpop.permute.xlu0 %1343
      %1347 = vset.pattern.permute.xlu0 0
      %1348 = vperm.xlu0 %1347, %v998
      %v1349 = vpop.permute.xlu0 %1348
      %1352 = vset.pattern.permute.xlu0 0
      %1353 = vperm.xlu0 %1352, %v999
      %v1354 = vpop.permute.xlu0 %1353
      %1357 = vset.pattern.permute.xlu0 0
      %1358 = vperm.xlu0 %1357, %v1000
      %v1359 = vpop.permute.xlu0 %1358
      %1362 = vset.pattern.permute.xlu0 0
      %1363 = vperm.xlu0 %1362, %v1001
      %v1364 = vpop.permute.xlu0 %1363
      %1367 = vset.pattern.permute.xlu0 0
      %1368 = vperm.xlu0 %1367, %v1002
      %v1369 = vpop.permute.xlu0 %1368
      %1372 = vset.pattern.permute.xlu0 0
      %1373 = vperm.xlu0 %1372, %v1003
      %v1374 = vpop.permute.xlu0 %1373
      %1377 = vset.pattern.permute.xlu0 0
      %1378 = vperm.xlu0 %1377, %v1004
      %v1379 = vpop.permute.xlu0 %1378
      %1382 = vset.pattern.permute.xlu0 0
      %1383 = vperm.xlu0 %1382, %v1005
      %v1384 = vpop.permute.xlu0 %1383
      %1387 = vset.pattern.permute.xlu0 0
      %1388 = vperm.xlu0 %1387, %v1006
      %v1389 = vpop.permute.xlu0 %1388
      %v1391 = vadd.f32 %v1167, %v1234
      %v1392 = vadd.f32 %v1168, %v1234
      %v1393 = vadd.f32 %v1169, %v1239
      %v1394 = vadd.f32 %v1170, %v1239
      %v1395 = vadd.f32 %v1171, %v1244
      %v1396 = vadd.f32 %v1172, %v1244
      %v1397 = vadd.f32 %v1173, %v1249
      %v1398 = vadd.f32 %v1174, %v1249
      %v1399 = vadd.f32 %v1175, %v1254
      %v1400 = vadd.f32 %v1176, %v1254
      %v1401 = vadd.f32 %v1177, %v1259
      %v1402 = vadd.f32 %v1178, %v1259
      %v1403 = vadd.f32 %v1179, %v1264
      %v1404 = vadd.f32 %v1180, %v1264
      %v1405 = vadd.f32 %v1181, %v1269
      %v1406 = vadd.f32 %v1182, %v1269
      %v1407 = vadd.f32 %v1183, %v1274
      %v1408 = vadd.f32 %v1184, %v1274
      %v1409 = vadd.f32 %v1185, %v1279
      %v1410 = vadd.f32 %v1186, %v1279
      %v1411 = vadd.f32 %v1187, %v1284
      %v1412 = vadd.f32 %v1188, %v1284
      %v1413 = vadd.f32 %v1189, %v1289
      %v1414 = vadd.f32 %v1190, %v1289
      %v1415 = vadd.f32 %v1191, %v1294
      %v1416 = vadd.f32 %v1192, %v1294
      %v1417 = vadd.f32 %v1193, %v1299
      %v1418 = vadd.f32 %v1194, %v1299
      %v1419 = vadd.f32 %v1195, %v1304
      %v1420 = vadd.f32 %v1196, %v1304
      %v1421 = vadd.f32 %v1197, %v1309
      %v1422 = vadd.f32 %v1198, %v1309
      %v1423 = vadd.f32 %v1199, %v1314
      %v1424 = vadd.f32 %v1200, %v1314
      %v1425 = vadd.f32 %v1201, %v1319
      %v1426 = vadd.f32 %v1202, %v1319
      %v1427 = vadd.f32 %v1203, %v1324
      %v1428 = vadd.f32 %v1204, %v1324
      %v1429 = vadd.f32 %v1205, %v1329
      %v1430 = vadd.f32 %v1206, %v1329
      %v1431 = vadd.f32 %v1207, %v1334
      %v1432 = vadd.f32 %v1208, %v1334
      %v1433 = vadd.f32 %v1209, %v1339
      %v1434 = vadd.f32 %v1210, %v1339
      %v1435 = vadd.f32 %v1211, %v1344
      %v1436 = vadd.f32 %v1212, %v1344
      %v1437 = vadd.f32 %v1213, %v1349
      %v1438 = vadd.f32 %v1214, %v1349
      %v1439 = vadd.f32 %v1215, %v1354
      %v1440 = vadd.f32 %v1216, %v1354
      %v1441 = vadd.f32 %v1217, %v1359
      %v1442 = vadd.f32 %v1218, %v1359
      %v1443 = vadd.f32 %v1219, %v1364
      %v1444 = vadd.f32 %v1220, %v1364
      %v1445 = vadd.f32 %v1221, %v1369
      %v1446 = vadd.f32 %v1222, %v1369
      %v1447 = vadd.f32 %v1223, %v1374
      %v1448 = vadd.f32 %v1224, %v1374
      %v1449 = vadd.f32 %v1225, %v1379
      %v1450 = vadd.f32 %v1226, %v1379
      %v1451 = vadd.f32 %v1227, %v1384
      %v1452 = vadd.f32 %v1228, %v1384
      %v1453 = vadd.f32 %v1229, %v1389
      %v1454 = vadd.f32 %v1230, %v1389
      %v1455 = vmax.f32 %v1391, 0.0
      %v1456 = vmax.f32 %v1392, 0.0
      %v1457 = vmax.f32 %v1393, 0.0
      %v1458 = vmax.f32 %v1394, 0.0
      %v1459 = vmax.f32 %v1395, 0.0
      %v1460 = vmax.f32 %v1396, 0.0
      %v1461 = vmax.f32 %v1397, 0.0
      %v1462 = vmax.f32 %v1398, 0.0
      %v1463 = vmax.f32 %v1399, 0.0
      %v1464 = vmax.f32 %v1400, 0.0
      %v1465 = vmax.f32 %v1401, 0.0
      %v1466 = vmax.f32 %v1402, 0.0
      %v1467 = vmax.f32 %v1403, 0.0
      %v1468 = vmax.f32 %v1404, 0.0
      %v1469 = vmax.f32 %v1405, 0.0
      %v1470 = vmax.f32 %v1406, 0.0
      %v1471 = vmax.f32 %v1407, 0.0
      %v1472 = vmax.f32 %v1408, 0.0
      %v1473 = vmax.f32 %v1409, 0.0
      %v1474 = vmax.f32 %v1410, 0.0
      %v1475 = vmax.f32 %v1411, 0.0
      %v1476 = vmax.f32 %v1412, 0.0
      %v1477 = vmax.f32 %v1413, 0.0
      %v1478 = vmax.f32 %v1414, 0.0
      %v1479 = vmax.f32 %v1415, 0.0
      %v1480 = vmax.f32 %v1416, 0.0
      %v1481 = vmax.f32 %v1417, 0.0
      %v1482 = vmax.f32 %v1418, 0.0
      %v1483 = vmax.f32 %v1419, 0.0
      %v1484 = vmax.f32 %v1420, 0.0
      %v1485 = vmax.f32 %v1421, 0.0
      %v1486 = vmax.f32 %v1422, 0.0
      %v1487 = vmax.f32 %v1423, 0.0
      %v1488 = vmax.f32 %v1424, 0.0
      %v1489 = vmax.f32 %v1425, 0.0
      %v1490 = vmax.f32 %v1426, 0.0
      %v1491 = vmax.f32 %v1427, 0.0
      %v1492 = vmax.f32 %v1428, 0.0
      %v1493 = vmax.f32 %v1429, 0.0
      %v1494 = vmax.f32 %v1430, 0.0
      %v1495 = vmax.f32 %v1431, 0.0
      %v1496 = vmax.f32 %v1432, 0.0
      %v1497 = vmax.f32 %v1433, 0.0
      %v1498 = vmax.f32 %v1434, 0.0
      %v1499 = vmax.f32 %v1435, 0.0
      %v1500 = vmax.f32 %v1436, 0.0
      %v1501 = vmax.f32 %v1437, 0.0
      %v1502 = vmax.f32 %v1438, 0.0
      %v1503 = vmax.f32 %v1439, 0.0
      %v1504 = vmax.f32 %v1440, 0.0
      %v1505 = vmax.f32 %v1441, 0.0
      %v1506 = vmax.f32 %v1442, 0.0
      %v1507 = vmax.f32 %v1443, 0.0
      %v1508 = vmax.f32 %v1444, 0.0
      %v1509 = vmax.f32 %v1445, 0.0
      %v1510 = vmax.f32 %v1446, 0.0
      %v1511 = vmax.f32 %v1447, 0.0
      %v1512 = vmax.f32 %v1448, 0.0
      %v1513 = vmax.f32 %v1449, 0.0
      %v1514 = vmax.f32 %v1450, 0.0
      %v1515 = vmax.f32 %v1451, 0.0
      %v1516 = vmax.f32 %v1452, 0.0
      %v1517 = vmax.f32 %v1453, 0.0
      %v1518 = vmax.f32 %v1454, 0.0
      %v1519 = vpack.c.bf16 %v1457, %v1455
      %v1520 = vpack.c.bf16 %v1458, %v1456
      %v1521 = vpack.c.bf16 %v1461, %v1459
      %v1522 = vpack.c.bf16 %v1462, %v1460
      %v1523 = vpack.c.bf16 %v1465, %v1463
      %v1524 = vpack.c.bf16 %v1466, %v1464
      %v1525 = vpack.c.bf16 %v1469, %v1467
      %v1526 = vpack.c.bf16 %v1470, %v1468
      %v1527 = vpack.c.bf16 %v1473, %v1471
      %v1528 = vpack.c.bf16 %v1474, %v1472
      %v1529 = vpack.c.bf16 %v1477, %v1475
      %v1530 = vpack.c.bf16 %v1478, %v1476
      %v1531 = vpack.c.bf16 %v1481, %v1479
      %v1532 = vpack.c.bf16 %v1482, %v1480
      %v1533 = vpack.c.bf16 %v1485, %v1483
      %v1534 = vpack.c.bf16 %v1486, %v1484
      %v1535 = vpack.c.bf16 %v1489, %v1487
      %v1536 = vpack.c.bf16 %v1490, %v1488
      %v1537 = vpack.c.bf16 %v1493, %v1491
      %v1538 = vpack.c.bf16 %v1494, %v1492
      %v1539 = vpack.c.bf16 %v1497, %v1495
      %v1540 = vpack.c.bf16 %v1498, %v1496
      %v1541 = vpack.c.bf16 %v1501, %v1499
      %v1542 = vpack.c.bf16 %v1502, %v1500
      %v1543 = vpack.c.bf16 %v1505, %v1503
      %v1544 = vpack.c.bf16 %v1506, %v1504
      %v1545 = vpack.c.bf16 %v1509, %v1507
      %v1546 = vpack.c.bf16 %v1510, %v1508
      %v1547 = vpack.c.bf16 %v1513, %v1511
      %v1548 = vpack.c.bf16 %v1514, %v1512
      %v1549 = vpack.c.bf16 %v1517, %v1515
      %v1550 = vpack.c.bf16 %v1518, %v1516
      %v1551 = vld [vmem:[%s197] sm:$0xff]
      %v1552 = vld [vmem:[%s197 + $0x8] sm:$0xff]
      %v1553 = vld [vmem:[%s197 + $0x10] sm:$0xff]
      %v1554 = vld [vmem:[%s197 + $0x18] sm:$0xff]
      %v1555 = vld [vmem:[%s197 + $0x20] sm:$0xff]
      %v1556 = vld [vmem:[%s197 + $0x28] sm:$0xff]
      %v1557 = vld [vmem:[%s197 + $0x30] sm:$0xff]
      %v1558 = vld [vmem:[%s197 + $0x38] sm:$0xff]
      %v1559 = vld [vmem:[%s197 + $0x40] sm:$0xff]
      %v1560 = vld [vmem:[%s197 + $0x48] sm:$0xff]
      %v1561 = vld [vmem:[%s197 + $0x50] sm:$0xff]
      %v1562 = vld [vmem:[%s197 + $0x58] sm:$0xff]
      %v1563 = vld [vmem:[%s197 + $0x60] sm:$0xff]
      %v1564 = vld [vmem:[%s197 + $0x68] sm:$0xff]
      %v1565 = vld [vmem:[%s197 + $0x70] sm:$0xff]
      %v1566 = vld [vmem:[%s197 + $0x78] sm:$0xff]
      %v1567 = vld [vmem:[%s197 + $0x80] sm:$0xff]
      %v1568 = vld [vmem:[%s197 + $0x88] sm:$0xff]
      %v1569 = vld [vmem:[%s197 + $0x90] sm:$0xff]
      %v1570 = vld [vmem:[%s197 + $0x98] sm:$0xff]
      %v1571 = vld [vmem:[%s197 + $0xa0] sm:$0xff]
      %v1572 = vld [vmem:[%s197 + $0xa8] sm:$0xff]
      %v1573 = vld [vmem:[%s197 + $0xb0] sm:$0xff]
      %v1574 = vld [vmem:[%s197 + $0xb8] sm:$0xff]
      %v1575 = vld [vmem:[%s197 + $0xc0] sm:$0xff]
      %v1576 = vld [vmem:[%s197 + $0xc8] sm:$0xff]
      %v1577 = vld [vmem:[%s197 + $0xd0] sm:$0xff]
      %v1578 = vld [vmem:[%s197 + $0xd8] sm:$0xff]
      %v1579 = vld [vmem:[%s197 + $0xe0] sm:$0xff]
      %v1580 = vld [vmem:[%s197 + $0xe8] sm:$0xff]
      %v1581 = vld [vmem:[%s197 + $0xf0] sm:$0xff]
      %v1582 = vld [vmem:[%s197 + $0xf8] sm:$0xff]
      %v1583 = vld [vmem:[%s197 + $0x100] sm:$0xff]
      %v1584 = vld [vmem:[%s197 + $0x108] sm:$0xff]
      %v1585 = vld [vmem:[%s197 + $0x110] sm:$0xff]
      %v1586 = vld [vmem:[%s197 + $0x118] sm:$0xff]
      %v1587 = vld [vmem:[%s197 + $0x120] sm:$0xff]
      %v1588 = vld [vmem:[%s197 + $0x128] sm:$0xff]
      %v1589 = vld [vmem:[%s197 + $0x130] sm:$0xff]
      %v1590 = vld [vmem:[%s197 + $0x138] sm:$0xff]
      %v1591 = vld [vmem:[%s197 + $0x140] sm:$0xff]
      %v1592 = vld [vmem:[%s197 + $0x148] sm:$0xff]
      %v1593 = vld [vmem:[%s197 + $0x150] sm:$0xff]
      %v1594 = vld [vmem:[%s197 + $0x158] sm:$0xff]
      %v1595 = vld [vmem:[%s197 + $0x160] sm:$0xff]
      %v1596 = vld [vmem:[%s197 + $0x168] sm:$0xff]
      %v1597 = vld [vmem:[%s197 + $0x170] sm:$0xff]
      %v1598 = vld [vmem:[%s197 + $0x178] sm:$0xff]
      %v1599 = vld [vmem:[%s197 + $0x180] sm:$0xff]
      %v1600 = vld [vmem:[%s197 + $0x188] sm:$0xff]
      %v1601 = vld [vmem:[%s197 + $0x190] sm:$0xff]
      %v1602 = vld [vmem:[%s197 + $0x198] sm:$0xff]
      %v1603 = vld [vmem:[%s197 + $0x1a0] sm:$0xff]
      %v1604 = vld [vmem:[%s197 + $0x1a8] sm:$0xff]
      %v1605 = vld [vmem:[%s197 + $0x1b0] sm:$0xff]
      %v1606 = vld [vmem:[%s197 + $0x1b8] sm:$0xff]
      %v1607 = vld [vmem:[%s197 + $0x1c0] sm:$0xff]
      %v1608 = vld [vmem:[%s197 + $0x1c8] sm:$0xff]
      %v1609 = vld [vmem:[%s197 + $0x1d0] sm:$0xff]
      %v1610 = vld [vmem:[%s197 + $0x1d8] sm:$0xff]
      %v1611 = vld [vmem:[%s197 + $0x1e0] sm:$0xff]
      %v1612 = vld [vmem:[%s197 + $0x1e8] sm:$0xff]
      %v1613 = vld [vmem:[%s197 + $0x1f0] sm:$0xff]
      %v1614 = vld [vmem:[%s197 + $0x1f8] sm:$0xff]
      %v1679 = vunpack.c.l.b16 %v1551
      %v1680 = vunpack.c.h.b16 %v1551
      %v1681 = vunpack.c.l.b16 %v1552
      %v1682 = vunpack.c.h.b16 %v1552
      %v1683 = vunpack.c.l.b16 %v1553
      %v1684 = vunpack.c.h.b16 %v1553
      %v1685 = vunpack.c.l.b16 %v1554
      %v1686 = vunpack.c.h.b16 %v1554
      %v1687 = vunpack.c.l.b16 %v1555
      %v1688 = vunpack.c.h.b16 %v1555
      %v1689 = vunpack.c.l.b16 %v1556
      %v1690 = vunpack.c.h.b16 %v1556
      %v1691 = vunpack.c.l.b16 %v1557
      %v1692 = vunpack.c.h.b16 %v1557
      %v1693 = vunpack.c.l.b16 %v1558
      %v1694 = vunpack.c.h.b16 %v1558
      %v1695 = vunpack.c.l.b16 %v1559
      %v1696 = vunpack.c.h.b16 %v1559
      %v1697 = vunpack.c.l.b16 %v1560
      %v1698 = vunpack.c.h.b16 %v1560
      %v1699 = vunpack.c.l.b16 %v1561
      %v1700 = vunpack.c.h.b16 %v1561
      %v1701 = vunpack.c.l.b16 %v1562
      %v1702 = vunpack.c.h.b16 %v1562
      %v1703 = vunpack.c.l.b16 %v1563
      %v1704 = vunpack.c.h.b16 %v1563
      %v1705 = vunpack.c.l.b16 %v1564
      %v1706 = vunpack.c.h.b16 %v1564
      %v1707 = vunpack.c.l.b16 %v1565
      %v1708 = vunpack.c.h.b16 %v1565
      %v1709 = vunpack.c.l.b16 %v1566
      %v1710 = vunpack.c.h.b16 %v1566
      %v1711 = vunpack.c.l.b16 %v1567
      %v1712 = vunpack.c.h.b16 %v1567
      %v1713 = vunpack.c.l.b16 %v1568
      %v1714 = vunpack.c.h.b16 %v1568
      %v1715 = vunpack.c.l.b16 %v1569
      %v1716 = vunpack.c.h.b16 %v1569
      %v1717 = vunpack.c.l.b16 %v1570
      %v1718 = vunpack.c.h.b16 %v1570
      %v1719 = vunpack.c.l.b16 %v1571
      %v1720 = vunpack.c.h.b16 %v1571
      %v1721 = vunpack.c.l.b16 %v1572
      %v1722 = vunpack.c.h.b16 %v1572
      %v1723 = vunpack.c.l.b16 %v1573
      %v1724 = vunpack.c.h.b16 %v1573
      %v1725 = vunpack.c.l.b16 %v1574
      %v1726 = vunpack.c.h.b16 %v1574
      %v1727 = vunpack.c.l.b16 %v1575
      %v1728 = vunpack.c.h.b16 %v1575
      %v1729 = vunpack.c.l.b16 %v1576
      %v1730 = vunpack.c.h.b16 %v1576
      %v1731 = vunpack.c.l.b16 %v1577
      %v1732 = vunpack.c.h.b16 %v1577
      %v1733 = vunpack.c.l.b16 %v1578
      %v1734 = vunpack.c.h.b16 %v1578
      %v1735 = vunpack.c.l.b16 %v1579
      %v1736 = vunpack.c.h.b16 %v1579
      %v1737 = vunpack.c.l.b16 %v1580
      %v1738 = vunpack.c.h.b16 %v1580
      %v1739 = vunpack.c.l.b16 %v1581
      %v1740 = vunpack.c.h.b16 %v1581
      %v1741 = vunpack.c.l.b16 %v1582
      %v1742 = vunpack.c.h.b16 %v1582
      %v1743 = vunpack.c.l.b16 %v1583
      %v1744 = vunpack.c.h.b16 %v1583
      %v1745 = vunpack.c.l.b16 %v1584
      %v1746 = vunpack.c.h.b16 %v1584
      %v1747 = vunpack.c.l.b16 %v1585
      %v1748 = vunpack.c.h.b16 %v1585
      %v1749 = vunpack.c.l.b16 %v1586
      %v1750 = vunpack.c.h.b16 %v1586
      %v1751 = vunpack.c.l.b16 %v1587
      %v1752 = vunpack.c.h.b16 %v1587
      %v1753 = vunpack.c.l.b16 %v1588
      %v1754 = vunpack.c.h.b16 %v1588
      %v1755 = vunpack.c.l.b16 %v1589
      %v1756 = vunpack.c.h.b16 %v1589
      %v1757 = vunpack.c.l.b16 %v1590
      %v1758 = vunpack.c.h.b16 %v1590
      %v1759 = vunpack.c.l.b16 %v1591
      %v1760 = vunpack.c.h.b16 %v1591
      %v1761 = vunpack.c.l.b16 %v1592
      %v1762 = vunpack.c.h.b16 %v1592
      %v1763 = vunpack.c.l.b16 %v1593
      %v1764 = vunpack.c.h.b16 %v1593
      %v1765 = vunpack.c.l.b16 %v1594
      %v1766 = vunpack.c.h.b16 %v1594
      %v1767 = vunpack.c.l.b16 %v1595
      %v1768 = vunpack.c.h.b16 %v1595
      %v1769 = vunpack.c.l.b16 %v1596
      %v1770 = vunpack.c.h.b16 %v1596
      %v1771 = vunpack.c.l.b16 %v1597
      %v1772 = vunpack.c.h.b16 %v1597
      %v1773 = vunpack.c.l.b16 %v1598
      %v1774 = vunpack.c.h.b16 %v1598
      %v1775 = vunpack.c.l.b16 %v1599
      %v1776 = vunpack.c.h.b16 %v1599
      %v1777 = vunpack.c.l.b16 %v1600
      %v1778 = vunpack.c.h.b16 %v1600
      %v1779 = vunpack.c.l.b16 %v1601
      %v1780 = vunpack.c.h.b16 %v1601
      %v1781 = vunpack.c.l.b16 %v1602
      %v1782 = vunpack.c.h.b16 %v1602
      %v1783 = vunpack.c.l.b16 %v1603
      %v1784 = vunpack.c.h.b16 %v1603
      %v1785 = vunpack.c.l.b16 %v1604
      %v1786 = vunpack.c.h.b16 %v1604
      %v1787 = vunpack.c.l.b16 %v1605
      %v1788 = vunpack.c.h.b16 %v1605
      %v1789 = vunpack.c.l.b16 %v1606
      %v1790 = vunpack.c.h.b16 %v1606
      %v1791 = vunpack.c.l.b16 %v1607
      %v1792 = vunpack.c.h.b16 %v1607
      %v1793 = vunpack.c.l.b16 %v1608
      %v1794 = vunpack.c.h.b16 %v1608
      %v1795 = vunpack.c.l.b16 %v1609
      %v1796 = vunpack.c.h.b16 %v1609
      %v1797 = vunpack.c.l.b16 %v1610
      %v1798 = vunpack.c.h.b16 %v1610
      %v1799 = vunpack.c.l.b16 %v1611
      %v1800 = vunpack.c.h.b16 %v1611
      %v1801 = vunpack.c.l.b16 %v1612
      %v1802 = vunpack.c.h.b16 %v1612
      %v1803 = vunpack.c.l.b16 %v1613
      %v1804 = vunpack.c.h.b16 %v1613
      %v1805 = vunpack.c.l.b16 %v1614
      %v1806 = vunpack.c.h.b16 %v1614
      %v1807 = vpack.c.b16 %v1681, %v1679
      %v1808 = vpack.c.b16 %v1682, %v1680
      %v1809 = vpack.c.b16 %v1685, %v1683
      %v1810 = vpack.c.b16 %v1686, %v1684
      %v1811 = vpack.c.b16 %v1689, %v1687
      %v1812 = vpack.c.b16 %v1690, %v1688
      %v1813 = vpack.c.b16 %v1693, %v1691
      %v1814 = vpack.c.b16 %v1694, %v1692
      %v1815 = vpack.c.b16 %v1697, %v1695
      %v1816 = vpack.c.b16 %v1698, %v1696
      %v1817 = vpack.c.b16 %v1701, %v1699
      %v1818 = vpack.c.b16 %v1702, %v1700
      %v1819 = vpack.c.b16 %v1705, %v1703
      %v1820 = vpack.c.b16 %v1706, %v1704
      %v1821 = vpack.c.b16 %v1709, %v1707
      %v1822 = vpack.c.b16 %v1710, %v1708
      %v1823 = vpack.c.b16 %v1713, %v1711
      %v1824 = vpack.c.b16 %v1714, %v1712
      %v1825 = vpack.c.b16 %v1717, %v1715
      %v1826 = vpack.c.b16 %v1718, %v1716
      %v1827 = vpack.c.b16 %v1721, %v1719
      %v1828 = vpack.c.b16 %v1722, %v1720
      %v1829 = vpack.c.b16 %v1725, %v1723
      %v1830 = vpack.c.b16 %v1726, %v1724
      %v1831 = vpack.c.b16 %v1729, %v1727
      %v1832 = vpack.c.b16 %v1730, %v1728
      %v1833 = vpack.c.b16 %v1733, %v1731
      %v1834 = vpack.c.b16 %v1734, %v1732
      %v1835 = vpack.c.b16 %v1737, %v1735
      %v1836 = vpack.c.b16 %v1738, %v1736
      %v1837 = vpack.c.b16 %v1741, %v1739
      %v1838 = vpack.c.b16 %v1742, %v1740
      %v1839 = vpack.c.b16 %v1745, %v1743
      %v1840 = vpack.c.b16 %v1746, %v1744
      %v1841 = vpack.c.b16 %v1749, %v1747
      %v1842 = vpack.c.b16 %v1750, %v1748
      %v1843 = vpack.c.b16 %v1753, %v1751
      %v1844 = vpack.c.b16 %v1754, %v1752
      %v1845 = vpack.c.b16 %v1757, %v1755
      %v1846 = vpack.c.b16 %v1758, %v1756
      %v1847 = vpack.c.b16 %v1761, %v1759
      %v1848 = vpack.c.b16 %v1762, %v1760
      %v1849 = vpack.c.b16 %v1765, %v1763
      %v1850 = vpack.c.b16 %v1766, %v1764
      %v1851 = vpack.c.b16 %v1769, %v1767
      %v1852 = vpack.c.b16 %v1770, %v1768
      %v1853 = vpack.c.b16 %v1773, %v1771
      %v1854 = vpack.c.b16 %v1774, %v1772
      %v1855 = vpack.c.b16 %v1777, %v1775
      %v1856 = vpack.c.b16 %v1778, %v1776
      %v1857 = vpack.c.b16 %v1781, %v1779
      %v1858 = vpack.c.b16 %v1782, %v1780
      %v1859 = vpack.c.b16 %v1785, %v1783
      %v1860 = vpack.c.b16 %v1786, %v1784
      %v1861 = vpack.c.b16 %v1789, %v1787
      %v1862 = vpack.c.b16 %v1790, %v1788
      %v1863 = vpack.c.b16 %v1793, %v1791
      %v1864 = vpack.c.b16 %v1794, %v1792
      %v1865 = vpack.c.b16 %v1797, %v1795
      %v1866 = vpack.c.b16 %v1798, %v1796
      %v1867 = vpack.c.b16 %v1801, %v1799
      %v1868 = vpack.c.b16 %v1802, %v1800
      %v1869 = vpack.c.b16 %v1805, %v1803
      %v1870 = vpack.c.b16 %v1806, %v1804
      %1935 = vmatprep.subr.bf16.mxu0 %v1520
      %1936 = vmatpush1.bf16.msra.mxu0 %v1519
      %1937 = vmatprep.subr.bf16.mxu0 %v1522
      %1938 = vmatpush1.bf16.msra.mxu0 %v1521
      %1939 = vmatprep.subr.bf16.mxu0 %v1524
      %1940 = vmatpush1.bf16.msra.mxu0 %v1523
      %1941 = vmatprep.subr.bf16.mxu0 %v1526
      %1942 = vmatpush1.bf16.msra.mxu0 %v1525
      %1943 = vmatprep.subr.bf16.mxu0 %v1528
      %1944 = vmatpush1.bf16.msra.mxu0 %v1527
      %1945 = vmatprep.subr.bf16.mxu0 %v1530
      %1946 = vmatpush1.bf16.msra.mxu0 %v1529
      %1947 = vmatprep.subr.bf16.mxu0 %v1532
      %1948 = vmatpush1.bf16.msra.mxu0 %v1531
      %1949 = vmatprep.subr.bf16.mxu0 %v1534
      %1950 = vmatpush1.bf16.msra.mxu0 %v1533
      %1951 = vmatprep.subr.bf16.mxu0 %v1536
      %1952 = vmatpush1.bf16.msra.mxu0 %v1535
      %1953 = vmatprep.subr.bf16.mxu0 %v1538
      %1954 = vmatpush1.bf16.msra.mxu0 %v1537
      %1955 = vmatprep.subr.bf16.mxu0 %v1540
      %1956 = vmatpush1.bf16.msra.mxu0 %v1539
      %1957 = vmatprep.subr.bf16.mxu0 %v1542
      %1958 = vmatpush1.bf16.msra.mxu0 %v1541
      %1959 = vmatprep.subr.bf16.mxu0 %v1544
      %1960 = vmatpush1.bf16.msra.mxu0 %v1543
      %1961 = vmatprep.subr.bf16.mxu0 %v1546
      %1962 = vmatpush1.bf16.msra.mxu0 %v1545
      %1963 = vmatprep.subr.bf16.mxu0 %v1548
      %1964 = vmatpush1.bf16.msra.mxu0 %v1547
      %1965 = vmatprep.subr.bf16.mxu0 %v1550
      %1966 = vmatpush1.bf16.msra.mxu0 %v1549
      %1967 = vmatprep.mubr.bf16.mxu0 %v1808
      %1968 = vmatmul.mubr.bf16.gmra.mrb[0].mxu0 %v1807
      %v1969 = vpop.f32.mrb[0].mxu0
      %v1970 = vadd.f32 0.0, %v1969
      %v1971 = vpop.f32.mrb[0].mxu0
      %v1972 = vadd.f32 0.0, %v1971
      %v1973 = vpop.f32.mrb[0].mxu0
      %v1974 = vadd.f32 0.0, %v1973
      %v1975 = vpop.f32.mrb[0].mxu0
      %v1976 = vadd.f32 0.0, %v1975
      %1977 = vmatprep.mubr.bf16.mxu0 %v1810
      %1978 = vmatmul.mubr.bf16.gmra.mrb[0].mxu0 %v1809
      %v1979 = vpop.f32.mrb[0].mxu0
      %v1980 = vadd.f32 0.0, %v1979
      %v1981 = vpop.f32.mrb[0].mxu0
      %v1982 = vadd.f32 0.0, %v1981
      %v1983 = vpop.f32.mrb[0].mxu0
      %v1984 = vadd.f32 0.0, %v1983
      %v1985 = vpop.f32.mrb[0].mxu0
      %v1986 = vadd.f32 0.0, %v1985
      %1987 = vmatprep.mubr.bf16.mxu0 %v1812
      %1988 = vmatmul.mubr.bf16.gmra.mrb[0].mxu0 %v1811
      %v1989 = vpop.f32.mrb[0].mxu0
      %v1990 = vadd.f32 0.0, %v1989
      %v1991 = vpop.f32.mrb[0].mxu0
      %v1992 = vadd.f32 0.0, %v1991
      %v1993 = vpop.f32.mrb[0].mxu0
      %v1994 = vadd.f32 0.0, %v1993
      %v1995 = vpop.f32.mrb[0].mxu0
      %v1996 = vadd.f32 0.0, %v1995
      %1997 = vmatprep.mubr.bf16.mxu0 %v1814
      %1998 = vmatmul.mubr.bf16.gmra.mrb[0].mxu0 %v1813
      %v1999 = vpop.f32.mrb[0].mxu0
      %v2000 = vadd.f32 0.0, %v1999
      %v2001 = vpop.f32.mrb[0].mxu0
      %v2002 = vadd.f32 0.0, %v2001
      %v2003 = vpop.f32.mrb[0].mxu0
      %v2004 = vadd.f32 0.0, %v2003
      %v2005 = vpop.f32.mrb[0].mxu0
      %v2006 = vadd.f32 0.0, %v2005
      %2007 = vmatprep.mubr.bf16.mxu0 %v1816
      %2008 = vmatmul.mubr.bf16.gmra.mrb[0].mxu0 %v1815
      %v2009 = vpop.f32.mrb[0].mxu0
      %v2010 = vadd.f32 0.0, %v2009
      %v2011 = vpop.f32.mrb[0].mxu0
      %v2012 = vadd.f32 0.0, %v2011
      %v2013 = vpop.f32.mrb[0].mxu0
      %v2014 = vadd.f32 0.0, %v2013
      %v2015 = vpop.f32.mrb[0].mxu0
      %v2016 = vadd.f32 0.0, %v2015
      %2017 = vmatprep.mubr.bf16.mxu0 %v1818
      %2018 = vmatmul.mubr.bf16.gmra.mrb[0].mxu0 %v1817
      %v2019 = vpop.f32.mrb[0].mxu0
      %v2020 = vadd.f32 0.0, %v2019
      %v2021 = vpop.f32.mrb[0].mxu0
      %v2022 = vadd.f32 0.0, %v2021
      %v2023 = vpop.f32.mrb[0].mxu0
      %v2024 = vadd.f32 0.0, %v2023
      %v2025 = vpop.f32.mrb[0].mxu0
      %v2026 = vadd.f32 0.0, %v2025
      %2027 = vmatprep.mubr.bf16.mxu0 %v1820
      %2028 = vmatmul.mubr.bf16.gmra.mrb[0].mxu0 %v1819
      %v2029 = vpop.f32.mrb[0].mxu0
      %v2030 = vadd.f32 0.0, %v2029
      %v2031 = vpop.f32.mrb[0].mxu0
      %v2032 = vadd.f32 0.0, %v2031
      %v2033 = vpop.f32.mrb[0].mxu0
      %v2034 = vadd.f32 0.0, %v2033
      %v2035 = vpop.f32.mrb[0].mxu0
      %v2036 = vadd.f32 0.0, %v2035
      %2037 = vmatprep.mubr.bf16.mxu0 %v1822
      %2038 = vmatmul.mubr.bf16.gmra.mrb[0].mxu0 %v1821
      %v2039 = vpop.f32.mrb[0].mxu0
      %v2040 = vadd.f32 0.0, %v2039
      %v2041 = vpop.f32.mrb[0].mxu0
      %v2042 = vadd.f32 0.0, %v2041
      %v2043 = vpop.f32.mrb[0].mxu0
      %v2044 = vadd.f32 0.0, %v2043
      %v2045 = vpop.f32.mrb[0].mxu0
      %v2046 = vadd.f32 0.0, %v2045
      %2047 = vmatprep.mubr.bf16.mxu0 %v1824
      %2048 = vmatmul.mubr.bf16.gmra.mrb[0].mxu0 %v1823
      %v2049 = vpop.f32.mrb[0].mxu0
      %v2050 = vadd.f32 0.0, %v2049
      %v2051 = vpop.f32.mrb[0].mxu0
      %v2052 = vadd.f32 0.0, %v2051
      %v2053 = vpop.f32.mrb[0].mxu0
      %v2054 = vadd.f32 0.0, %v2053
      %v2055 = vpop.f32.mrb[0].mxu0
      %v2056 = vadd.f32 0.0, %v2055
      %2057 = vmatprep.mubr.bf16.mxu0 %v1826
      %2058 = vmatmul.mubr.bf16.gmra.mrb[0].mxu0 %v1825
      %v2059 = vpop.f32.mrb[0].mxu0
      %v2060 = vadd.f32 0.0, %v2059
      %v2061 = vpop.f32.mrb[0].mxu0
      %v2062 = vadd.f32 0.0, %v2061
      %v2063 = vpop.f32.mrb[0].mxu0
      %v2064 = vadd.f32 0.0, %v2063
      %v2065 = vpop.f32.mrb[0].mxu0
      %v2066 = vadd.f32 0.0, %v2065
      %2067 = vmatprep.mubr.bf16.mxu0 %v1828
      %2068 = vmatmul.mubr.bf16.gmra.mrb[0].mxu0 %v1827
      %v2069 = vpop.f32.mrb[0].mxu0
      %v2070 = vadd.f32 0.0, %v2069
      %v2071 = vpop.f32.mrb[0].mxu0
      %v2072 = vadd.f32 0.0, %v2071
      %v2073 = vpop.f32.mrb[0].mxu0
      %v2074 = vadd.f32 0.0, %v2073
      %v2075 = vpop.f32.mrb[0].mxu0
      %v2076 = vadd.f32 0.0, %v2075
      %2077 = vmatprep.mubr.bf16.mxu0 %v1830
      %2078 = vmatmul.mubr.bf16.gmra.mrb[0].mxu0 %v1829
      %v2079 = vpop.f32.mrb[0].mxu0
      %v2080 = vadd.f32 0.0, %v2079
      %v2081 = vpop.f32.mrb[0].mxu0
      %v2082 = vadd.f32 0.0, %v2081
      %v2083 = vpop.f32.mrb[0].mxu0
      %v2084 = vadd.f32 0.0, %v2083
      %v2085 = vpop.f32.mrb[0].mxu0
      %v2086 = vadd.f32 0.0, %v2085
      %2087 = vmatprep.mubr.bf16.mxu0 %v1832
      %2088 = vmatmul.mubr.bf16.gmra.mrb[0].mxu0 %v1831
      %v2089 = vpop.f32.mrb[0].mxu0
      %v2090 = vadd.f32 0.0, %v2089
      %v2091 = vpop.f32.mrb[0].mxu0
      %v2092 = vadd.f32 0.0, %v2091
      %v2093 = vpop.f32.mrb[0].mxu0
      %v2094 = vadd.f32 0.0, %v2093
      %v2095 = vpop.f32.mrb[0].mxu0
      %v2096 = vadd.f32 0.0, %v2095
      %2097 = vmatprep.mubr.bf16.mxu0 %v1834
      %2098 = vmatmul.mubr.bf16.gmra.mrb[0].mxu0 %v1833
      %v2099 = vpop.f32.mrb[0].mxu0
      %v2100 = vadd.f32 0.0, %v2099
      %v2101 = vpop.f32.mrb[0].mxu0
      %v2102 = vadd.f32 0.0, %v2101
      %v2103 = vpop.f32.mrb[0].mxu0
      %v2104 = vadd.f32 0.0, %v2103
      %v2105 = vpop.f32.mrb[0].mxu0
      %v2106 = vadd.f32 0.0, %v2105
      %2107 = vmatprep.mubr.bf16.mxu0 %v1836
      %2108 = vmatmul.mubr.bf16.gmra.mrb[0].mxu0 %v1835
      %v2109 = vpop.f32.mrb[0].mxu0
      %v2110 = vadd.f32 0.0, %v2109
      %v2111 = vpop.f32.mrb[0].mxu0
      %v2112 = vadd.f32 0.0, %v2111
      %v2113 = vpop.f32.mrb[0].mxu0
      %v2114 = vadd.f32 0.0, %v2113
      %v2115 = vpop.f32.mrb[0].mxu0
      %v2116 = vadd.f32 0.0, %v2115
      %2117 = vmatprep.mubr.bf16.mxu0 %v1838
      %2118 = vmatmul.mubr.bf16.gmra.mrb[0].mxu0 %v1837
      %v2119 = vpop.f32.mrb[0].mxu0
      %v2120 = vadd.f32 0.0, %v2119
      %v2121 = vpop.f32.mrb[0].mxu0
      %v2122 = vadd.f32 0.0, %v2121
      %v2123 = vpop.f32.mrb[0].mxu0
      %v2124 = vadd.f32 0.0, %v2123
      %v2125 = vpop.f32.mrb[0].mxu0
      %v2126 = vadd.f32 0.0, %v2125
      %2127 = vmatprep.mubr.bf16.mxu0 %v1840
      %2128 = vmatmul.mubr.bf16.gmra.mrb[0].mxu0 %v1839
      %v2129 = vpop.f32.mrb[0].mxu0
      %v2130 = vadd.f32 0.0, %v2129
      %v2131 = vpop.f32.mrb[0].mxu0
      %v2132 = vadd.f32 0.0, %v2131
      %v2133 = vpop.f32.mrb[0].mxu0
      %v2134 = vadd.f32 0.0, %v2133
      %v2135 = vpop.f32.mrb[0].mxu0
      %v2136 = vadd.f32 0.0, %v2135
      %2137 = vmatprep.mubr.bf16.mxu0 %v1842
      %2138 = vmatmul.mubr.bf16.gmra.mrb[0].mxu0 %v1841
      %v2139 = vpop.f32.mrb[0].mxu0
      %v2140 = vadd.f32 0.0, %v2139
      %v2141 = vpop.f32.mrb[0].mxu0
      %v2142 = vadd.f32 0.0, %v2141
      %v2143 = vpop.f32.mrb[0].mxu0
      %v2144 = vadd.f32 0.0, %v2143
      %v2145 = vpop.f32.mrb[0].mxu0
      %v2146 = vadd.f32 0.0, %v2145
      %2147 = vmatprep.mubr.bf16.mxu0 %v1844
      %2148 = vmatmul.mubr.bf16.gmra.mrb[0].mxu0 %v1843
      %v2149 = vpop.f32.mrb[0].mxu0
      %v2150 = vadd.f32 0.0, %v2149
      %v2151 = vpop.f32.mrb[0].mxu0
      %v2152 = vadd.f32 0.0, %v2151
      %v2153 = vpop.f32.mrb[0].mxu0
      %v2154 = vadd.f32 0.0, %v2153
      %v2155 = vpop.f32.mrb[0].mxu0
      %v2156 = vadd.f32 0.0, %v2155
      %2157 = vmatprep.mubr.bf16.mxu0 %v1846
      %2158 = vmatmul.mubr.bf16.gmra.mrb[0].mxu0 %v1845
      %v2159 = vpop.f32.mrb[0].mxu0
      %v2160 = vadd.f32 0.0, %v2159
      %v2161 = vpop.f32.mrb[0].mxu0
      %v2162 = vadd.f32 0.0, %v2161
      %v2163 = vpop.f32.mrb[0].mxu0
      %v2164 = vadd.f32 0.0, %v2163
      %v2165 = vpop.f32.mrb[0].mxu0
      %v2166 = vadd.f32 0.0, %v2165
      %2167 = vmatprep.mubr.bf16.mxu0 %v1848
      %2168 = vmatmul.mubr.bf16.gmra.mrb[0].mxu0 %v1847
      %v2169 = vpop.f32.mrb[0].mxu0
      %v2170 = vadd.f32 0.0, %v2169
      %v2171 = vpop.f32.mrb[0].mxu0
      %v2172 = vadd.f32 0.0, %v2171
      %v2173 = vpop.f32.mrb[0].mxu0
      %v2174 = vadd.f32 0.0, %v2173
      %v2175 = vpop.f32.mrb[0].mxu0
      %v2176 = vadd.f32 0.0, %v2175
      %2177 = vmatprep.mubr.bf16.mxu0 %v1850
      %2178 = vmatmul.mubr.bf16.gmra.mrb[0].mxu0 %v1849
      %v2179 = vpop.f32.mrb[0].mxu0
      %v2180 = vadd.f32 0.0, %v2179
      %v2181 = vpop.f32.mrb[0].mxu0
      %v2182 = vadd.f32 0.0, %v2181
      %v2183 = vpop.f32.mrb[0].mxu0
      %v2184 = vadd.f32 0.0, %v2183
      %v2185 = vpop.f32.mrb[0].mxu0
      %v2186 = vadd.f32 0.0, %v2185
      %2187 = vmatprep.mubr.bf16.mxu0 %v1852
      %2188 = vmatmul.mubr.bf16.gmra.mrb[0].mxu0 %v1851
      %v2189 = vpop.f32.mrb[0].mxu0
      %v2190 = vadd.f32 0.0, %v2189
      %v2191 = vpop.f32.mrb[0].mxu0
      %v2192 = vadd.f32 0.0, %v2191
      %v2193 = vpop.f32.mrb[0].mxu0
      %v2194 = vadd.f32 0.0, %v2193
      %v2195 = vpop.f32.mrb[0].mxu0
      %v2196 = vadd.f32 0.0, %v2195
      %2197 = vmatprep.mubr.bf16.mxu0 %v1854
      %2198 = vmatmul.mubr.bf16.gmra.mrb[0].mxu0 %v1853
      %v2199 = vpop.f32.mrb[0].mxu0
      %v2200 = vadd.f32 0.0, %v2199
      %v2201 = vpop.f32.mrb[0].mxu0
      %v2202 = vadd.f32 0.0, %v2201
      %v2203 = vpop.f32.mrb[0].mxu0
      %v2204 = vadd.f32 0.0, %v2203
      %v2205 = vpop.f32.mrb[0].mxu0
      %v2206 = vadd.f32 0.0, %v2205
      %2207 = vmatprep.mubr.bf16.mxu0 %v1856
      %2208 = vmatmul.mubr.bf16.gmra.mrb[0].mxu0 %v1855
      %v2209 = vpop.f32.mrb[0].mxu0
      %v2210 = vadd.f32 0.0, %v2209
      %v2211 = vpop.f32.mrb[0].mxu0
      %v2212 = vadd.f32 0.0, %v2211
      %v2213 = vpop.f32.mrb[0].mxu0
      %v2214 = vadd.f32 0.0, %v2213
      %v2215 = vpop.f32.mrb[0].mxu0
      %v2216 = vadd.f32 0.0, %v2215
      %2217 = vmatprep.mubr.bf16.mxu0 %v1858
      %2218 = vmatmul.mubr.bf16.gmra.mrb[0].mxu0 %v1857
      %v2219 = vpop.f32.mrb[0].mxu0
      %v2220 = vadd.f32 0.0, %v2219
      %v2221 = vpop.f32.mrb[0].mxu0
      %v2222 = vadd.f32 0.0, %v2221
      %v2223 = vpop.f32.mrb[0].mxu0
      %v2224 = vadd.f32 0.0, %v2223
      %v2225 = vpop.f32.mrb[0].mxu0
      %v2226 = vadd.f32 0.0, %v2225
      %2227 = vmatprep.mubr.bf16.mxu0 %v1860
      %2228 = vmatmul.mubr.bf16.gmra.mrb[0].mxu0 %v1859
      %v2229 = vpop.f32.mrb[0].mxu0
      %v2230 = vadd.f32 0.0, %v2229
      %v2231 = vpop.f32.mrb[0].mxu0
      %v2232 = vadd.f32 0.0, %v2231
      %v2233 = vpop.f32.mrb[0].mxu0
      %v2234 = vadd.f32 0.0, %v2233
      %v2235 = vpop.f32.mrb[0].mxu0
      %v2236 = vadd.f32 0.0, %v2235
      %2237 = vmatprep.mubr.bf16.mxu0 %v1862
      %2238 = vmatmul.mubr.bf16.gmra.mrb[0].mxu0 %v1861
      %v2239 = vpop.f32.mrb[0].mxu0
      %v2240 = vadd.f32 0.0, %v2239
      %v2241 = vpop.f32.mrb[0].mxu0
      %v2242 = vadd.f32 0.0, %v2241
      %v2243 = vpop.f32.mrb[0].mxu0
      %v2244 = vadd.f32 0.0, %v2243
      %v2245 = vpop.f32.mrb[0].mxu0
      %v2246 = vadd.f32 0.0, %v2245
      %2247 = vmatprep.mubr.bf16.mxu0 %v1864
      %2248 = vmatmul.mubr.bf16.gmra.mrb[0].mxu0 %v1863
      %v2249 = vpop.f32.mrb[0].mxu0
      %v2250 = vadd.f32 0.0, %v2249
      %v2251 = vpop.f32.mrb[0].mxu0
      %v2252 = vadd.f32 0.0, %v2251
      %v2253 = vpop.f32.mrb[0].mxu0
      %v2254 = vadd.f32 0.0, %v2253
      %v2255 = vpop.f32.mrb[0].mxu0
      %v2256 = vadd.f32 0.0, %v2255
      %2257 = vmatprep.mubr.bf16.mxu0 %v1866
      %2258 = vmatmul.mubr.bf16.gmra.mrb[0].mxu0 %v1865
      %v2259 = vpop.f32.mrb[0].mxu0
      %v2260 = vadd.f32 0.0, %v2259
      %v2261 = vpop.f32.mrb[0].mxu0
      %v2262 = vadd.f32 0.0, %v2261
      %v2263 = vpop.f32.mrb[0].mxu0
      %v2264 = vadd.f32 0.0, %v2263
      %v2265 = vpop.f32.mrb[0].mxu0
      %v2266 = vadd.f32 0.0, %v2265
      %2267 = vmatprep.mubr.bf16.mxu0 %v1868
      %2268 = vmatmul.mubr.bf16.gmra.mrb[0].mxu0 %v1867
      %v2269 = vpop.f32.mrb[0].mxu0
      %v2270 = vadd.f32 0.0, %v2269
      %v2271 = vpop.f32.mrb[0].mxu0
      %v2272 = vadd.f32 0.0, %v2271
      %v2273 = vpop.f32.mrb[0].mxu0
      %v2274 = vadd.f32 0.0, %v2273
      %v2275 = vpop.f32.mrb[0].mxu0
      %v2276 = vadd.f32 0.0, %v2275
      %2277 = vmatprep.mubr.bf16.mxu0 %v1870
      %2278 = vmatmul.mubr.bf16.gmra.mrb[0].mxu0 %v1869
      %v2279 = vpop.f32.mrb[0].mxu0
      %v2280 = vadd.f32 0.0, %v2279
      %v2281 = vpop.f32.mrb[0].mxu0
      %v2282 = vadd.f32 0.0, %v2281
      %v2283 = vpop.f32.mrb[0].mxu0
      %v2284 = vadd.f32 0.0, %v2283
      %v2285 = vpop.f32.mrb[0].mxu0
      %v2286 = vadd.f32 0.0, %v2285
      %2287 = vdwg.mxu0
      %2288 = vst [vmem:[%s204] sm:$0xff] %v1970
      %2289 = vst.msk [vmem:[%s204 + $0x8] sm:$0xff] %vm270, %v1972
      %2290 = vst [vmem:[%s204 + $0x10] sm:$0xff] %v1974
      %2291 = vst.msk [vmem:[%s204 + $0x18] sm:$0xff] %vm270, %v1976
      %2292 = vst [vmem:[%s204 + $0x20] sm:$0xff] %v1980
      %2293 = vst.msk [vmem:[%s204 + $0x28] sm:$0xff] %vm270, %v1982
      %2294 = vst [vmem:[%s204 + $0x30] sm:$0xff] %v1984
      %2295 = vst.msk [vmem:[%s204 + $0x38] sm:$0xff] %vm270, %v1986
      %2296 = vst [vmem:[%s204 + $0x40] sm:$0xff] %v1990
      %2297 = vst.msk [vmem:[%s204 + $0x48] sm:$0xff] %vm270, %v1992
      %2298 = vst [vmem:[%s204 + $0x50] sm:$0xff] %v1994
      %2299 = vst.msk [vmem:[%s204 + $0x58] sm:$0xff] %vm270, %v1996
      %2300 = vst [vmem:[%s204 + $0x60] sm:$0xff] %v2000
      %2301 = vst.msk [vmem:[%s204 + $0x68] sm:$0xff] %vm270, %v2002
      %2302 = vst [vmem:[%s204 + $0x70] sm:$0xff] %v2004
      %2303 = vst.msk [vmem:[%s204 + $0x78] sm:$0xff] %vm270, %v2006
      %2304 = vst [vmem:[%s204 + $0x80] sm:$0xff] %v2010
      %2305 = vst.msk [vmem:[%s204 + $0x88] sm:$0xff] %vm270, %v2012
      %2306 = vst [vmem:[%s204 + $0x90] sm:$0xff] %v2014
      %2307 = vst.msk [vmem:[%s204 + $0x98] sm:$0xff] %vm270, %v2016
      %2308 = vst [vmem:[%s204 + $0xa0] sm:$0xff] %v2020
      %2309 = vst.msk [vmem:[%s204 + $0xa8] sm:$0xff] %vm270, %v2022
      %2310 = vst [vmem:[%s204 + $0xb0] sm:$0xff] %v2024
      %2311 = vst.msk [vmem:[%s204 + $0xb8] sm:$0xff] %vm270, %v2026
      %2312 = vst [vmem:[%s204 + $0xc0] sm:$0xff] %v2030
      %2313 = vst.msk [vmem:[%s204 + $0xc8] sm:$0xff] %vm270, %v2032
      %2314 = vst [vmem:[%s204 + $0xd0] sm:$0xff] %v2034
      %2315 = vst.msk [vmem:[%s204 + $0xd8] sm:$0xff] %vm270, %v2036
      %2316 = vst [vmem:[%s204 + $0xe0] sm:$0xff] %v2040
      %2317 = vst.msk [vmem:[%s204 + $0xe8] sm:$0xff] %vm270, %v2042
      %2318 = vst [vmem:[%s204 + $0xf0] sm:$0xff] %v2044
      %2319 = vst.msk [vmem:[%s204 + $0xf8] sm:$0xff] %vm270, %v2046
      %2320 = vst [vmem:[%s204 + $0x100] sm:$0xff] %v2050
      %2321 = vst.msk [vmem:[%s204 + $0x108] sm:$0xff] %vm270, %v2052
      %2322 = vst [vmem:[%s204 + $0x110] sm:$0xff] %v2054
      %2323 = vst.msk [vmem:[%s204 + $0x118] sm:$0xff] %vm270, %v2056
      %2324 = vst [vmem:[%s204 + $0x120] sm:$0xff] %v2060
      %2325 = vst.msk [vmem:[%s204 + $0x128] sm:$0xff] %vm270, %v2062
      %2326 = vst [vmem:[%s204 + $0x130] sm:$0xff] %v2064
      %2327 = vst.msk [vmem:[%s204 + $0x138] sm:$0xff] %vm270, %v2066
      %2328 = vst [vmem:[%s204 + $0x140] sm:$0xff] %v2070
      %2329 = vst.msk [vmem:[%s204 + $0x148] sm:$0xff] %vm270, %v2072
      %2330 = vst [vmem:[%s204 + $0x150] sm:$0xff] %v2074
      %2331 = vst.msk [vmem:[%s204 + $0x158] sm:$0xff] %vm270, %v2076
      %2332 = vst [vmem:[%s204 + $0x160] sm:$0xff] %v2080
      %2333 = vst.msk [vmem:[%s204 + $0x168] sm:$0xff] %vm270, %v2082
      %2334 = vst [vmem:[%s204 + $0x170] sm:$0xff] %v2084
      %2335 = vst.msk [vmem:[%s204 + $0x178] sm:$0xff] %vm270, %v2086
      %2336 = vst [vmem:[%s204 + $0x180] sm:$0xff] %v2090
      %2337 = vst.msk [vmem:[%s204 + $0x188] sm:$0xff] %vm270, %v2092
      %2338 = vst [vmem:[%s204 + $0x190] sm:$0xff] %v2094
      %2339 = vst.msk [vmem:[%s204 + $0x198] sm:$0xff] %vm270, %v2096
      %2340 = vst [vmem:[%s204 + $0x1a0] sm:$0xff] %v2100
      %2341 = vst.msk [vmem:[%s204 + $0x1a8] sm:$0xff] %vm270, %v2102
      %2342 = vst [vmem:[%s204 + $0x1b0] sm:$0xff] %v2104
      %2343 = vst.msk [vmem:[%s204 + $0x1b8] sm:$0xff] %vm270, %v2106
      %2344 = vst [vmem:[%s204 + $0x1c0] sm:$0xff] %v2110
      %2345 = vst.msk [vmem:[%s204 + $0x1c8] sm:$0xff] %vm270, %v2112
      %2346 = vst [vmem:[%s204 + $0x1d0] sm:$0xff] %v2114
      %2347 = vst.msk [vmem:[%s204 + $0x1d8] sm:$0xff] %vm270, %v2116
      %2348 = vst [vmem:[%s204 + $0x1e0] sm:$0xff] %v2120
      %2349 = vst.msk [vmem:[%s204 + $0x1e8] sm:$0xff] %vm270, %v2122
      %2350 = vst [vmem:[%s204 + $0x1f0] sm:$0xff] %v2124
      %2351 = vst.msk [vmem:[%s204 + $0x1f8] sm:$0xff] %vm270, %v2126
      %2352 = vst [vmem:[%s204 + $0x200] sm:$0xff] %v2130
      %2353 = vst.msk [vmem:[%s204 + $0x208] sm:$0xff] %vm270, %v2132
      %2354 = vst [vmem:[%s204 + $0x210] sm:$0xff] %v2134
      %2355 = vst.msk [vmem:[%s204 + $0x218] sm:$0xff] %vm270, %v2136
      %2356 = vst [vmem:[%s204 + $0x220] sm:$0xff] %v2140
      %2357 = vst.msk [vmem:[%s204 + $0x228] sm:$0xff] %vm270, %v2142
      %2358 = vst [vmem:[%s204 + $0x230] sm:$0xff] %v2144
      %2359 = vst.msk [vmem:[%s204 + $0x238] sm:$0xff] %vm270, %v2146
      %2360 = vst [vmem:[%s204 + $0x240] sm:$0xff] %v2150
      %2361 = vst.msk [vmem:[%s204 + $0x248] sm:$0xff] %vm270, %v2152
      %2362 = vst [vmem:[%s204 + $0x250] sm:$0xff] %v2154
      %2363 = vst.msk [vmem:[%s204 + $0x258] sm:$0xff] %vm270, %v2156
      %2364 = vst [vmem:[%s204 + $0x260] sm:$0xff] %v2160
      %2365 = vst.msk [vmem:[%s204 + $0x268] sm:$0xff] %vm270, %v2162
      %2366 = vst [vmem:[%s204 + $0x270] sm:$0xff] %v2164
      %2367 = vst.msk [vmem:[%s204 + $0x278] sm:$0xff] %vm270, %v2166
      %2368 = vst [vmem:[%s204 + $0x280] sm:$0xff] %v2170
      %2369 = vst.msk [vmem:[%s204 + $0x288] sm:$0xff] %vm270, %v2172
      %2370 = vst [vmem:[%s204 + $0x290] sm:$0xff] %v2174
      %2371 = vst.msk [vmem:[%s204 + $0x298] sm:$0xff] %vm270, %v2176
      %2372 = vst [vmem:[%s204 + $0x2a0] sm:$0xff] %v2180
      %2373 = vst.msk [vmem:[%s204 + $0x2a8] sm:$0xff] %vm270, %v2182
      %2374 = vst [vmem:[%s204 + $0x2b0] sm:$0xff] %v2184
      %2375 = vst.msk [vmem:[%s204 + $0x2b8] sm:$0xff] %vm270, %v2186
      %2376 = vst [vmem:[%s204 + $0x2c0] sm:$0xff] %v2190
      %2377 = vst.msk [vmem:[%s204 + $0x2c8] sm:$0xff] %vm270, %v2192
      %2378 = vst [vmem:[%s204 + $0x2d0] sm:$0xff] %v2194
      %2379 = vst.msk [vmem:[%s204 + $0x2d8] sm:$0xff] %vm270, %v2196
      %2380 = vst [vmem:[%s204 + $0x2e0] sm:$0xff] %v2200
      %2381 = vst.msk [vmem:[%s204 + $0x2e8] sm:$0xff] %vm270, %v2202
      %2382 = vst [vmem:[%s204 + $0x2f0] sm:$0xff] %v2204
      %2383 = vst.msk [vmem:[%s204 + $0x2f8] sm:$0xff] %vm270, %v2206
      %2384 = vst [vmem:[%s204 + $0x300] sm:$0xff] %v2210
      %2385 = vst.msk [vmem:[%s204 + $0x308] sm:$0xff] %vm270, %v2212
      %2386 = vst [vmem:[%s204 + $0x310] sm:$0xff] %v2214
      %2387 = vst.msk [vmem:[%s204 + $0x318] sm:$0xff] %vm270, %v2216
      %2388 = vst [vmem:[%s204 + $0x320] sm:$0xff] %v2220
      %2389 = vst.msk [vmem:[%s204 + $0x328] sm:$0xff] %vm270, %v2222
      %2390 = vst [vmem:[%s204 + $0x330] sm:$0xff] %v2224
      %2391 = vst.msk [vmem:[%s204 + $0x338] sm:$0xff] %vm270, %v2226
      %2392 = vst [vmem:[%s204 + $0x340] sm:$0xff] %v2230
      %2393 = vst.msk [vmem:[%s204 + $0x348] sm:$0xff] %vm270, %v2232
      %2394 = vst [vmem:[%s204 + $0x350] sm:$0xff] %v2234
      %2395 = vst.msk [vmem:[%s204 + $0x358] sm:$0xff] %vm270, %v2236
      %2396 = vst [vmem:[%s204 + $0x360] sm:$0xff] %v2240
      %2397 = vst.msk [vmem:[%s204 + $0x368] sm:$0xff] %vm270, %v2242
      %2398 = vst [vmem:[%s204 + $0x370] sm:$0xff] %v2244
      %2399 = vst.msk [vmem:[%s204 + $0x378] sm:$0xff] %vm270, %v2246
      %2400 = vst [vmem:[%s204 + $0x380] sm:$0xff] %v2250
      %2401 = vst.msk [vmem:[%s204 + $0x388] sm:$0xff] %vm270, %v2252
      %2402 = vst [vmem:[%s204 + $0x390] sm:$0xff] %v2254
      %2403 = vst.msk [vmem:[%s204 + $0x398] sm:$0xff] %vm270, %v2256
      %2404 = vst [vmem:[%s204 + $0x3a0] sm:$0xff] %v2260
      %2405 = vst.msk [vmem:[%s204 + $0x3a8] sm:$0xff] %vm270, %v2262
      %2406 = vst [vmem:[%s204 + $0x3b0] sm:$0xff] %v2264
      %2407 = vst.msk [vmem:[%s204 + $0x3b8] sm:$0xff] %vm270, %v2266
      %2408 = vst [vmem:[%s204 + $0x3c0] sm:$0xff] %v2270
      %2409 = vst.msk [vmem:[%s204 + $0x3c8] sm:$0xff] %vm270, %v2272
      %2410 = vst [vmem:[%s204 + $0x3d0] sm:$0xff] %v2274
      %2411 = vst.msk [vmem:[%s204 + $0x3d8] sm:$0xff] %vm270, %v2276
      %2412 = vst [vmem:[%s204 + $0x3e0] sm:$0xff] %v2280
      %2413 = vst.msk [vmem:[%s204 + $0x3e8] sm:$0xff] %vm270, %v2282
      %2414 = vst [vmem:[%s204 + $0x3f0] sm:$0xff] %v2284
      %2415 = vst.msk [vmem:[%s204 + $0x3f8] sm:$0xff] %vm270, %v2286
      %s2416 = smul.u32 64, %s15
      %p2417 = scmp.lt.s32.totalorder %s2416, 127
      %s2418 = scalar_select %p2417, %s2416, 127
      %s2419 = smul.addr %s2418, 2
      %s2420 = smul.addr %s2419, 8
      %s2421 = scalar_lea.vmem %s4, %s2420
      // Predicated region
      $region37: #{tpu_custom_call.1} parent=35 // pred_check
        %p2422 = pneg %p122
      $region38: #{tpu_custom_call.1} parent=35 // pred_check_branch
        %2424 = sbr.rel (%p2422) target = $region40
      $region39: #{tpu_custom_call.1} parent=35 // pred_region
        %s2425 = smul.u32 64, %s15
      $region40: #{tpu_custom_call.1} parent=35 // pred_fallthru
        _
    $region36: #{tpu_custom_call.1} parent=5 // pred_fallthru
      _
    %p2426 = scmp.le.s32.totalorder 2, %s10
    // Predicated region
    $region41: #{tpu_custom_call.1} parent=5 // pred_check
      %p2427 = pneg %p2426
    $region42: #{tpu_custom_call.1} parent=5 // pred_check_branch
      %2429 = sbr.rel (%p2427) target = $region44
    $region43: #{tpu_custom_call.1} parent=5 // pred_region
      %s2430 = ssub.s32 %s10, 2
      // Predicated region
      $region45: #{tpu_custom_call.1} parent=43 // pred_check
        %p2431 = pneg %p128
      $region46: #{tpu_custom_call.1} parent=43 // pred_check_branch
        %2433 = sbr.rel (%p2431) target = $region48
      $region47: #{tpu_custom_call.1} parent=43 // pred_region
        %s2434 = smul.u32 64, %s16
        %p2435 = scmp.lt.s32.totalorder %s2434, 127
        %s2436 = scalar_select %p2435, %s2434, 127
        %s2437 = smul.addr %s2436, 2
        %s2438 = smul.addr %s2437, 8
        %s2439 = scalar_lea.vmem %s4, %s2438
      $region48: #{tpu_custom_call.1} parent=43 // pred_fallthru
        _
    $region44: #{tpu_custom_call.1} parent=5 // pred_fallthru
      _
  $region6: #{tpu_custom_call.1} parent=0 // loop_footer
    %s14 = sadd.s32 1, %s10
  $region7: #{tpu_custom_call.1} parent=0 // loop_footer_branch
    %9 = sbr.rel target = $region3
  $region8: #{tpu_custom_call.1} parent=0 // loop_exit
    _

</llo_original>
